<compile_context>
chip_gen: v7x
topology: tpu7x:2x2x1
jax: 0.10.0
libtpu: 0.0.40
codegen_flags: <defaults>
</compile_context>

<pallas_src>
import jax
import jax.numpy as jnp
import numpy as np
from jax import lax
from jax.experimental import pallas as pl
from jax.experimental.pallas import tpu as pltpu


def _lstm_kernel(x_ref, wih_ref, whh_ref, b_ref,
                 states_ref, c_out_ref, inp_sc):
    S, B = x_ref.shape
    H = whh_ref.shape[0]

    # Hoisted input projection for every timestep at once:
    # (S, B, 1) * (1, 4H) + (1, 4H) -> (S, B, 4H)
    inp_sc[...] = x_ref[...][:, :, None] * wih_ref[...] + b_ref[...]

    whh = whh_ref[...]          # (H, 4H), gate columns ordered (i, f, o, g)

    def step(t, carry):
        h, c = carry
        gates = inp_sc[t] + jnp.dot(h, whh, preferred_element_type=jnp.float32)
        sig = jax.nn.sigmoid(gates[:, :3 * H])      # i, f, o in one EUP slab
        g_g = jnp.tanh(gates[:, 3 * H:])            # g in one EUP slab
        i_g = sig[:, 0 * H:1 * H]
        f_g = sig[:, 1 * H:2 * H]
        o_g = sig[:, 2 * H:3 * H]
        c_new = f_g * c + i_g * g_g
        h_new = o_g * jnp.tanh(c_new)
        states_ref[t] = h_new                       # resident output block
        return h_new, c_new

    h0 = jnp.zeros((B, H), jnp.float32)
    c0 = jnp.zeros((B, H), jnp.float32)
    _, c_fin = lax.fori_loop(0, S, step, (h0, c0), unroll=True)
    c_out_ref[...] = c_fin                          # final cell, written once


@jax.jit
def encoder_forward(x, w_ih, w_hh, b_ih, b_hh):
    """x: (S, B) float32.  Returns (encoder_states (S,B,H), hidden (1,B,H), cell (1,B,H))."""
    S, B = x.shape
    H = w_hh.shape[1]
    G = 4 * H
    B_pad = max(8, -(-B // 8) * 8)      # pad batch to full sublanes

    # Reorder PyTorch gate blocks (i, f, g, o) -> (i, f, o, g) so the kernel can
    # apply sigmoid to one contiguous 3H slab and tanh to the remaining H slab.
    def reorder(a):
        i, f, g, o = jnp.split(a, 4, axis=0)
        return jnp.concatenate([i, f, o, g], axis=0)

    wih_row = reorder(w_ih).reshape(1, G).astype(jnp.float32)   # == W_ih^T (input_size == 1)
    whh_t = reorder(w_hh).T.astype(jnp.float32)                 # (H, 4H)   == W_hh^T
    bias = reorder(b_ih + b_hh).reshape(1, G).astype(jnp.float32)

    x_p = jnp.pad(x.astype(jnp.float32), ((0, 0), (0, B_pad - B)))

    states_p, cell_p = pl.pallas_call(
        _lstm_kernel,
        out_shape=(
            jax.ShapeDtypeStruct((S, B_pad, H), jnp.float32),
            jax.ShapeDtypeStruct((B_pad, H), jnp.float32),
        ),
        scratch_shapes=[pltpu.VMEM((S, B_pad, G), jnp.float32)],  # hoisted input proj
    )(x_p, wih_row, whh_t, bias)

    states = states_p[:, :B, :]
    hidden = states[S - 1][None]        # (1, B, H) == final h (num_layers = 1)
    cell = cell_p[None, :B, :]          # (1, B, H)
    return states, hidden, cell


def encoder_reference(x, w_ih, w_hh, b_ih, b_hh):
    """Pure-JAX reference matching PyTorch LSTM semantics (gate order i, f, g, o)."""
    S, B = x.shape
    H = w_hh.shape[1]
    h0 = jnp.zeros((B, H), jnp.float32)
    c0 = jnp.zeros((B, H), jnp.float32)

    def step(carry, x_t):
        h, c = carry
        gates = (x_t[:, None] @ w_ih.T.reshape(1, 4 * H)
                 + h @ w_hh.T + b_ih + b_hh)
        i_g = jax.nn.sigmoid(gates[:, 0 * H:1 * H])
        f_g = jax.nn.sigmoid(gates[:, 1 * H:2 * H])
        g_g = jnp.tanh(gates[:, 2 * H:3 * H])
        o_g = jax.nn.sigmoid(gates[:, 3 * H:4 * H])
        c_new = f_g * c + i_g * g_g
        h_new = o_g * jnp.tanh(c_new)
        return (h_new, c_new), h_new

    (h_f, c_f), hs = lax.scan(step, (h0, c0), x)
    return hs, h_f[None], c_f[None]


if __name__ == "__main__":
    S, B, H = 8, 4, 128   # seq_len, batch, hidden_size (num_layers = 1)

    key = jax.random.PRNGKey(0)
    k_x, k1, k2, k3, k4 = jax.random.split(key, 5)

    # Deterministic PyTorch-style init: U(-1/sqrt(H), 1/sqrt(H))
    bound = 1.0 / np.sqrt(H)
    w_ih = jax.random.uniform(k1, (4 * H, 1), jnp.float32, -bound, bound)
    w_hh = jax.random.uniform(k2, (4 * H, H), jnp.float32, -bound, bound)
    b_ih = jax.random.uniform(k3, (4 * H,), jnp.float32, -bound, bound)
    b_hh = jax.random.uniform(k4, (4 * H,), jnp.float32, -bound, bound)

    x = jax.random.normal(k_x, (S, B), jnp.float32)

    states, hidden, cell = encoder_forward(x, w_ih, w_hh, b_ih, b_hh)
    jax.block_until_ready((states, hidden, cell))

    ref_states, ref_hidden, ref_cell = encoder_reference(x, w_ih, w_hh, b_ih, b_hh)
    np.testing.assert_allclose(np.asarray(states), np.asarray(ref_states),
                               rtol=1e-4, atol=1e-4)
    np.testing.assert_allclose(np.asarray(hidden), np.asarray(ref_hidden),
                               rtol=1e-4, atol=1e-4)
    np.testing.assert_allclose(np.asarray(cell), np.asarray(ref_cell),
                               rtol=1e-4, atol=1e-4)

    print("KERNEL_OK")
</pallas_src>

<mosaic_0001>
module attributes {stable_mosaic.version = 11 : i64} {
  func.func @_lstm_kernel(%arg0: memref<8x8xf32, #tpu.memory_space<vmem>>, %arg1: memref<1x512xf32, #tpu.memory_space<vmem>>, %arg2: memref<128x512xf32, #tpu.memory_space<vmem>>, %arg3: memref<1x512xf32, #tpu.memory_space<vmem>>, %arg4: memref<8x8x128xf32, #tpu.memory_space<vmem>>, %arg5: memref<8x128xf32, #tpu.memory_space<vmem>>, %arg6: memref<8x8x512xf32, #tpu.memory_space<vmem>>) attributes {dimension_semantics = [], scalar_prefetch = 0 : i64, scratch_operands = 1 : i64, tpu.core_type = #tpu.core_type<tc>} {
    %c0 = arith.constant 0 : index
    %c0_0 = arith.constant 0 : index
    %0 = vector.load %arg0[%c0, %c0_0] : memref<8x8xf32, #tpu.memory_space<vmem>>, vector<8x8xf32>
    %1 = vector.shape_cast %0 : vector<8x8xf32> to vector<8x8x1xf32>
    %c0_1 = arith.constant 0 : index
    %c0_2 = arith.constant 0 : index
    %2 = vector.load %arg1[%c0_1, %c0_2] : memref<1x512xf32, #tpu.memory_space<vmem>>, vector<1x512xf32>
    %3 = vector.shape_cast %2 : vector<1x512xf32> to vector<1x1x512xf32>
    %4 = vector.broadcast %1 : vector<8x8x1xf32> to vector<8x8x512xf32>
    %5 = vector.broadcast %3 : vector<1x1x512xf32> to vector<8x8x512xf32>
    %6 = arith.mulf %4, %5 : vector<8x8x512xf32>
    %c0_3 = arith.constant 0 : index
    %c0_4 = arith.constant 0 : index
    %7 = vector.load %arg3[%c0_3, %c0_4] : memref<1x512xf32, #tpu.memory_space<vmem>>, vector<1x512xf32>
    %8 = vector.shape_cast %7 : vector<1x512xf32> to vector<1x1x512xf32>
    %9 = vector.broadcast %8 : vector<1x1x512xf32> to vector<8x8x512xf32>
    %10 = arith.addf %6, %9 : vector<8x8x512xf32>
    %c0_5 = arith.constant 0 : index
    %c0_6 = arith.constant 0 : index
    %c0_7 = arith.constant 0 : index
    %11 = vector.load %arg6[%c0_5, %c0_6, %c0_7] : memref<8x8x512xf32, #tpu.memory_space<vmem>>, vector<8x8x512xf32>
    tpu.vector_store %arg6[%c0_5, %c0_6, %c0_7], %10 {strides = array<i32>} : memref<8x8x512xf32, #tpu.memory_space<vmem>>, vector<8x8x512xf32>,
    %c0_8 = arith.constant 0 : index
    %c0_9 = arith.constant 0 : index
    %12 = vector.load %arg2[%c0_8, %c0_9] : memref<128x512xf32, #tpu.memory_space<vmem>>, vector<128x512xf32>
    %cst = arith.constant 0.000000e+00 : f32
    %13 = vector.broadcast %cst : f32 to vector<8x128xf32>
    %cst_10 = arith.constant 0.000000e+00 : f32
    %14 = vector.broadcast %cst_10 : f32 to vector<8x128xf32>
    %c0_i32 = arith.constant 0 : i32
    %15 = arith.index_cast %c0_i32 : i32 to index
    %c0_11 = arith.constant 0 : index
    %c0_12 = arith.constant 0 : index
    %16 = vector.load %arg6[%15, %c0_11, %c0_12] : memref<8x8x512xf32, #tpu.memory_space<vmem>>, vector<1x8x512xf32>
    %17 = vector.shape_cast %16 : vector<1x8x512xf32> to vector<8x512xf32>
    %cst_13 = arith.constant dense<0.000000e+00> : vector<8x512xf32>
    %18 = tpu.matmul %13, %12, %cst_13 {dimension_numbers = #tpu.dot_dimension_numbers<[1], [0], [0], [1], [0, 0, 1, 1], [], []>} : vector<8x128xf32>, vector<128x512xf32>, vector<8x512xf32> -> vector<8x512xf32>
    %19 = arith.addf %17, %18 : vector<8x512xf32>
    %20 = vector.extract_strided_slice %19 {offsets = [0, 0], sizes = [8, 384], strides = [1, 1]} : vector<8x512xf32> to vector<8x384xf32>
    %21 = arith.negf %20 : vector<8x384xf32>
    %22 = math.exp %21 : vector<8x384xf32>
    %cst_14 = arith.constant 1.000000e+00 : f32
    %23 = vector.broadcast %cst_14 : f32 to vector<8x384xf32>
    %24 = arith.addf %23, %22 : vector<8x384xf32>
    %25 = arith.divf %23, %24 : vector<8x384xf32>
    %26 = vector.extract_strided_slice %19 {offsets = [0, 384], sizes = [8, 128], strides = [1, 1]} : vector<8x512xf32> to vector<8x128xf32>
    %27 = math.tanh %26 : vector<8x128xf32>
    %28 = vector.extract_strided_slice %25 {offsets = [0, 0], sizes = [8, 128], strides = [1, 1]} : vector<8x384xf32> to vector<8x128xf32>
    %29 = vector.extract_strided_slice %25 {offsets = [0, 128], sizes = [8, 128], strides = [1, 1]} : vector<8x384xf32> to vector<8x128xf32>
    %30 = vector.extract_strided_slice %25 {offsets = [0, 256], sizes = [8, 128], strides = [1, 1]} : vector<8x384xf32> to vector<8x128xf32>
    %31 = arith.mulf %29, %14 : vector<8x128xf32>
    %32 = arith.mulf %28, %27 : vector<8x128xf32>
    %33 = arith.addf %31, %32 : vector<8x128xf32>
    %34 = math.tanh %33 : vector<8x128xf32>
    %35 = arith.mulf %30, %34 : vector<8x128xf32>
    %36 = arith.index_cast %c0_i32 : i32 to index
    %c0_15 = arith.constant 0 : index
    %c0_16 = arith.constant 0 : index
    %37 = vector.load %arg4[%36, %c0_15, %c0_16] : memref<8x8x128xf32, #tpu.memory_space<vmem>>, vector<1x8x128xf32>
    %38 = vector.shape_cast %37 : vector<1x8x128xf32> to vector<8x128xf32>
    %39 = vector.shape_cast %35 : vector<8x128xf32> to vector<1x8x128xf32>
    tpu.vector_store %arg4[%36, %c0_15, %c0_16], %39 {strides = array<i32>} : memref<8x8x128xf32, #tpu.memory_space<vmem>>, vector<1x8x128xf32>,
    %c1_i32 = arith.constant 1 : i32
    %40 = arith.index_cast %c1_i32 : i32 to index
    %c0_17 = arith.constant 0 : index
    %c0_18 = arith.constant 0 : index
    %41 = vector.load %arg6[%40, %c0_17, %c0_18] : memref<8x8x512xf32, #tpu.memory_space<vmem>>, vector<1x8x512xf32>
    %42 = vector.shape_cast %41 : vector<1x8x512xf32> to vector<8x512xf32>
    %cst_19 = arith.constant dense<0.000000e+00> : vector<8x512xf32>
    %43 = tpu.matmul %35, %12, %cst_19 {dimension_numbers = #tpu.dot_dimension_numbers<[1], [0], [0], [1], [0, 0, 1, 1], [], []>} : vector<8x128xf32>, vector<128x512xf32>, vector<8x512xf32> -> vector<8x512xf32>
    %44 = arith.addf %42, %43 : vector<8x512xf32>
    %45 = vector.extract_strided_slice %44 {offsets = [0, 0], sizes = [8, 384], strides = [1, 1]} : vector<8x512xf32> to vector<8x384xf32>
    %46 = arith.negf %45 : vector<8x384xf32>
    %47 = math.exp %46 : vector<8x384xf32>
    %cst_20 = arith.constant 1.000000e+00 : f32
    %48 = vector.broadcast %cst_20 : f32 to vector<8x384xf32>
    %49 = arith.addf %48, %47 : vector<8x384xf32>
    %50 = arith.divf %48, %49 : vector<8x384xf32>
    %51 = vector.extract_strided_slice %44 {offsets = [0, 384], sizes = [8, 128], strides = [1, 1]} : vector<8x512xf32> to vector<8x128xf32>
    %52 = math.tanh %51 : vector<8x128xf32>
    %53 = vector.extract_strided_slice %50 {offsets = [0, 0], sizes = [8, 128], strides = [1, 1]} : vector<8x384xf32> to vector<8x128xf32>
    %54 = vector.extract_strided_slice %50 {offsets = [0, 128], sizes = [8, 128], strides = [1, 1]} : vector<8x384xf32> to vector<8x128xf32>
    %55 = vector.extract_strided_slice %50 {offsets = [0, 256], sizes = [8, 128], strides = [1, 1]} : vector<8x384xf32> to vector<8x128xf32>
    %56 = arith.mulf %54, %33 : vector<8x128xf32>
    %57 = arith.mulf %53, %52 : vector<8x128xf32>
    %58 = arith.addf %56, %57 : vector<8x128xf32>
    %59 = math.tanh %58 : vector<8x128xf32>
    %60 = arith.mulf %55, %59 : vector<8x128xf32>
    %61 = arith.index_cast %c1_i32 : i32 to index
    %c0_21 = arith.constant 0 : index
    %c0_22 = arith.constant 0 : index
    %62 = vector.load %arg4[%61, %c0_21, %c0_22] : memref<8x8x128xf32, #tpu.memory_space<vmem>>, vector<1x8x128xf32>
    %63 = vector.shape_cast %62 : vector<1x8x128xf32> to vector<8x128xf32>
    %64 = vector.shape_cast %60 : vector<8x128xf32> to vector<1x8x128xf32>
    tpu.vector_store %arg4[%61, %c0_21, %c0_22], %64 {strides = array<i32>} : memref<8x8x128xf32, #tpu.memory_space<vmem>>, vector<1x8x128xf32>,
    %c2_i32 = arith.constant 2 : i32
    %65 = arith.index_cast %c2_i32 : i32 to index
    %c0_23 = arith.constant 0 : index
    %c0_24 = arith.constant 0 : index
    %66 = vector.load %arg6[%65, %c0_23, %c0_24] : memref<8x8x512xf32, #tpu.memory_space<vmem>>, vector<1x8x512xf32>
    %67 = vector.shape_cast %66 : vector<1x8x512xf32> to vector<8x512xf32>
    %cst_25 = arith.constant dense<0.000000e+00> : vector<8x512xf32>
    %68 = tpu.matmul %60, %12, %cst_25 {dimension_numbers = #tpu.dot_dimension_numbers<[1], [0], [0], [1], [0, 0, 1, 1], [], []>} : vector<8x128xf32>, vector<128x512xf32>, vector<8x512xf32> -> vector<8x512xf32>
    %69 = arith.addf %67, %68 : vector<8x512xf32>
    %70 = vector.extract_strided_slice %69 {offsets = [0, 0], sizes = [8, 384], strides = [1, 1]} : vector<8x512xf32> to vector<8x384xf32>
    %71 = arith.negf %70 : vector<8x384xf32>
    %72 = math.exp %71 : vector<8x384xf32>
    %cst_26 = arith.constant 1.000000e+00 : f32
    %73 = vector.broadcast %cst_26 : f32 to vector<8x384xf32>
    %74 = arith.addf %73, %72 : vector<8x384xf32>
    %75 = arith.divf %73, %74 : vector<8x384xf32>
    %76 = vector.extract_strided_slice %69 {offsets = [0, 384], sizes = [8, 128], strides = [1, 1]} : vector<8x512xf32> to vector<8x128xf32>
    %77 = math.tanh %76 : vector<8x128xf32>
    %78 = vector.extract_strided_slice %75 {offsets = [0, 0], sizes = [8, 128], strides = [1, 1]} : vector<8x384xf32> to vector<8x128xf32>
    %79 = vector.extract_strided_slice %75 {offsets = [0, 128], sizes = [8, 128], strides = [1, 1]} : vector<8x384xf32> to vector<8x128xf32>
    %80 = vector.extract_strided_slice %75 {offsets = [0, 256], sizes = [8, 128], strides = [1, 1]} : vector<8x384xf32> to vector<8x128xf32>
    %81 = arith.mulf %79, %58 : vector<8x128xf32>
    %82 = arith.mulf %78, %77 : vector<8x128xf32>
    %83 = arith.addf %81, %82 : vector<8x128xf32>
    %84 = math.tanh %83 : vector<8x128xf32>
    %85 = arith.mulf %80, %84 : vector<8x128xf32>
    %86 = arith.index_cast %c2_i32 : i32 to index
    %c0_27 = arith.constant 0 : index
    %c0_28 = arith.constant 0 : index
    %87 = vector.load %arg4[%86, %c0_27, %c0_28] : memref<8x8x128xf32, #tpu.memory_space<vmem>>, vector<1x8x128xf32>
    %88 = vector.shape_cast %87 : vector<1x8x128xf32> to vector<8x128xf32>
    %89 = vector.shape_cast %85 : vector<8x128xf32> to vector<1x8x128xf32>
    tpu.vector_store %arg4[%86, %c0_27, %c0_28], %89 {strides = array<i32>} : memref<8x8x128xf32, #tpu.memory_space<vmem>>, vector<1x8x128xf32>,
    %c3_i32 = arith.constant 3 : i32
    %90 = arith.index_cast %c3_i32 : i32 to index
    %c0_29 = arith.constant 0 : index
    %c0_30 = arith.constant 0 : index
    %91 = vector.load %arg6[%90, %c0_29, %c0_30] : memref<8x8x512xf32, #tpu.memory_space<vmem>>, vector<1x8x512xf32>
    %92 = vector.shape_cast %91 : vector<1x8x512xf32> to vector<8x512xf32>
    %cst_31 = arith.constant dense<0.000000e+00> : vector<8x512xf32>
    %93 = tpu.matmul %85, %12, %cst_31 {dimension_numbers = #tpu.dot_dimension_numbers<[1], [0], [0], [1], [0, 0, 1, 1], [], []>} : vector<8x128xf32>, vector<128x512xf32>, vector<8x512xf32> -> vector<8x512xf32>
    %94 = arith.addf %92, %93 : vector<8x512xf32>
    %95 = vector.extract_strided_slice %94 {offsets = [0, 0], sizes = [8, 384], strides = [1, 1]} : vector<8x512xf32> to vector<8x384xf32>
    %96 = arith.negf %95 : vector<8x384xf32>
    %97 = math.exp %96 : vector<8x384xf32>
    %cst_32 = arith.constant 1.000000e+00 : f32
    %98 = vector.broadcast %cst_32 : f32 to vector<8x384xf32>
    %99 = arith.addf %98, %97 : vector<8x384xf32>
    %100 = arith.divf %98, %99 : vector<8x384xf32>
    %101 = vector.extract_strided_slice %94 {offsets = [0, 384], sizes = [8, 128], strides = [1, 1]} : vector<8x512xf32> to vector<8x128xf32>
    %102 = math.tanh %101 : vector<8x128xf32>
    %103 = vector.extract_strided_slice %100 {offsets = [0, 0], sizes = [8, 128], strides = [1, 1]} : vector<8x384xf32> to vector<8x128xf32>
    %104 = vector.extract_strided_slice %100 {offsets = [0, 128], sizes = [8, 128], strides = [1, 1]} : vector<8x384xf32> to vector<8x128xf32>
    %105 = vector.extract_strided_slice %100 {offsets = [0, 256], sizes = [8, 128], strides = [1, 1]} : vector<8x384xf32> to vector<8x128xf32>
    %106 = arith.mulf %104, %83 : vector<8x128xf32>
    %107 = arith.mulf %103, %102 : vector<8x128xf32>
    %108 = arith.addf %106, %107 : vector<8x128xf32>
    %109 = math.tanh %108 : vector<8x128xf32>
    %110 = arith.mulf %105, %109 : vector<8x128xf32>
    %111 = arith.index_cast %c3_i32 : i32 to index
    %c0_33 = arith.constant 0 : index
    %c0_34 = arith.constant 0 : index
    %112 = vector.load %arg4[%111, %c0_33, %c0_34] : memref<8x8x128xf32, #tpu.memory_space<vmem>>, vector<1x8x128xf32>
    %113 = vector.shape_cast %112 : vector<1x8x128xf32> to vector<8x128xf32>
    %114 = vector.shape_cast %110 : vector<8x128xf32> to vector<1x8x128xf32>
    tpu.vector_store %arg4[%111, %c0_33, %c0_34], %114 {strides = array<i32>} : memref<8x8x128xf32, #tpu.memory_space<vmem>>, vector<1x8x128xf32>,
    %c4_i32 = arith.constant 4 : i32
    %115 = arith.index_cast %c4_i32 : i32 to index
    %c0_35 = arith.constant 0 : index
    %c0_36 = arith.constant 0 : index
    %116 = vector.load %arg6[%115, %c0_35, %c0_36] : memref<8x8x512xf32, #tpu.memory_space<vmem>>, vector<1x8x512xf32>
    %117 = vector.shape_cast %116 : vector<1x8x512xf32> to vector<8x512xf32>
    %cst_37 = arith.constant dense<0.000000e+00> : vector<8x512xf32>
    %118 = tpu.matmul %110, %12, %cst_37 {dimension_numbers = #tpu.dot_dimension_numbers<[1], [0], [0], [1], [0, 0, 1, 1], [], []>} : vector<8x128xf32>, vector<128x512xf32>, vector<8x512xf32> -> vector<8x512xf32>
    %119 = arith.addf %117, %118 : vector<8x512xf32>
    %120 = vector.extract_strided_slice %119 {offsets = [0, 0], sizes = [8, 384], strides = [1, 1]} : vector<8x512xf32> to vector<8x384xf32>
    %121 = arith.negf %120 : vector<8x384xf32>
    %122 = math.exp %121 : vector<8x384xf32>
    %cst_38 = arith.constant 1.000000e+00 : f32
    %123 = vector.broadcast %cst_38 : f32 to vector<8x384xf32>
    %124 = arith.addf %123, %122 : vector<8x384xf32>
    %125 = arith.divf %123, %124 : vector<8x384xf32>
    %126 = vector.extract_strided_slice %119 {offsets = [0, 384], sizes = [8, 128], strides = [1, 1]} : vector<8x512xf32> to vector<8x128xf32>
    %127 = math.tanh %126 : vector<8x128xf32>
    %128 = vector.extract_strided_slice %125 {offsets = [0, 0], sizes = [8, 128], strides = [1, 1]} : vector<8x384xf32> to vector<8x128xf32>
    %129 = vector.extract_strided_slice %125 {offsets = [0, 128], sizes = [8, 128], strides = [1, 1]} : vector<8x384xf32> to vector<8x128xf32>
    %130 = vector.extract_strided_slice %125 {offsets = [0, 256], sizes = [8, 128], strides = [1, 1]} : vector<8x384xf32> to vector<8x128xf32>
    %131 = arith.mulf %129, %108 : vector<8x128xf32>
    %132 = arith.mulf %128, %127 : vector<8x128xf32>
    %133 = arith.addf %131, %132 : vector<8x128xf32>
    %134 = math.tanh %133 : vector<8x128xf32>
    %135 = arith.mulf %130, %134 : vector<8x128xf32>
    %136 = arith.index_cast %c4_i32 : i32 to index
    %c0_39 = arith.constant 0 : index
    %c0_40 = arith.constant 0 : index
    %137 = vector.load %arg4[%136, %c0_39, %c0_40] : memref<8x8x128xf32, #tpu.memory_space<vmem>>, vector<1x8x128xf32>
    %138 = vector.shape_cast %137 : vector<1x8x128xf32> to vector<8x128xf32>
    %139 = vector.shape_cast %135 : vector<8x128xf32> to vector<1x8x128xf32>
    tpu.vector_store %arg4[%136, %c0_39, %c0_40], %139 {strides = array<i32>} : memref<8x8x128xf32, #tpu.memory_space<vmem>>, vector<1x8x128xf32>,
    %c5_i32 = arith.constant 5 : i32
    %140 = arith.index_cast %c5_i32 : i32 to index
    %c0_41 = arith.constant 0 : index
    %c0_42 = arith.constant 0 : index
    %141 = vector.load %arg6[%140, %c0_41, %c0_42] : memref<8x8x512xf32, #tpu.memory_space<vmem>>, vector<1x8x512xf32>
    %142 = vector.shape_cast %141 : vector<1x8x512xf32> to vector<8x512xf32>
    %cst_43 = arith.constant dense<0.000000e+00> : vector<8x512xf32>
    %143 = tpu.matmul %135, %12, %cst_43 {dimension_numbers = #tpu.dot_dimension_numbers<[1], [0], [0], [1], [0, 0, 1, 1], [], []>} : vector<8x128xf32>, vector<128x512xf32>, vector<8x512xf32> -> vector<8x512xf32>
    %144 = arith.addf %142, %143 : vector<8x512xf32>
    %145 = vector.extract_strided_slice %144 {offsets = [0, 0], sizes = [8, 384], strides = [1, 1]} : vector<8x512xf32> to vector<8x384xf32>
    %146 = arith.negf %145 : vector<8x384xf32>
    %147 = math.exp %146 : vector<8x384xf32>
    %cst_44 = arith.constant 1.000000e+00 : f32
    %148 = vector.broadcast %cst_44 : f32 to vector<8x384xf32>
    %149 = arith.addf %148, %147 : vector<8x384xf32>
    %150 = arith.divf %148, %149 : vector<8x384xf32>
    %151 = vector.extract_strided_slice %144 {offsets = [0, 384], sizes = [8, 128], strides = [1, 1]} : vector<8x512xf32> to vector<8x128xf32>
    %152 = math.tanh %151 : vector<8x128xf32>
    %153 = vector.extract_strided_slice %150 {offsets = [0, 0], sizes = [8, 128], strides = [1, 1]} : vector<8x384xf32> to vector<8x128xf32>
    %154 = vector.extract_strided_slice %150 {offsets = [0, 128], sizes = [8, 128], strides = [1, 1]} : vector<8x384xf32> to vector<8x128xf32>
    %155 = vector.extract_strided_slice %150 {offsets = [0, 256], sizes = [8, 128], strides = [1, 1]} : vector<8x384xf32> to vector<8x128xf32>
    %156 = arith.mulf %154, %133 : vector<8x128xf32>
    %157 = arith.mulf %153, %152 : vector<8x128xf32>
    %158 = arith.addf %156, %157 : vector<8x128xf32>
    %159 = math.tanh %158 : vector<8x128xf32>
    %160 = arith.mulf %155, %159 : vector<8x128xf32>
    %161 = arith.index_cast %c5_i32 : i32 to index
    %c0_45 = arith.constant 0 : index
    %c0_46 = arith.constant 0 : index
    %162 = vector.load %arg4[%161, %c0_45, %c0_46] : memref<8x8x128xf32, #tpu.memory_space<vmem>>, vector<1x8x128xf32>
    %163 = vector.shape_cast %162 : vector<1x8x128xf32> to vector<8x128xf32>
    %164 = vector.shape_cast %160 : vector<8x128xf32> to vector<1x8x128xf32>
    tpu.vector_store %arg4[%161, %c0_45, %c0_46], %164 {strides = array<i32>} : memref<8x8x128xf32, #tpu.memory_space<vmem>>, vector<1x8x128xf32>,
    %c6_i32 = arith.constant 6 : i32
    %165 = arith.index_cast %c6_i32 : i32 to index
    %c0_47 = arith.constant 0 : index
    %c0_48 = arith.constant 0 : index
    %166 = vector.load %arg6[%165, %c0_47, %c0_48] : memref<8x8x512xf32, #tpu.memory_space<vmem>>, vector<1x8x512xf32>
    %167 = vector.shape_cast %166 : vector<1x8x512xf32> to vector<8x512xf32>
    %cst_49 = arith.constant dense<0.000000e+00> : vector<8x512xf32>
    %168 = tpu.matmul %160, %12, %cst_49 {dimension_numbers = #tpu.dot_dimension_numbers<[1], [0], [0], [1], [0, 0, 1, 1], [], []>} : vector<8x128xf32>, vector<128x512xf32>, vector<8x512xf32> -> vector<8x512xf32>
    %169 = arith.addf %167, %168 : vector<8x512xf32>
    %170 = vector.extract_strided_slice %169 {offsets = [0, 0], sizes = [8, 384], strides = [1, 1]} : vector<8x512xf32> to vector<8x384xf32>
    %171 = arith.negf %170 : vector<8x384xf32>
    %172 = math.exp %171 : vector<8x384xf32>
    %cst_50 = arith.constant 1.000000e+00 : f32
    %173 = vector.broadcast %cst_50 : f32 to vector<8x384xf32>
    %174 = arith.addf %173, %172 : vector<8x384xf32>
    %175 = arith.divf %173, %174 : vector<8x384xf32>
    %176 = vector.extract_strided_slice %169 {offsets = [0, 384], sizes = [8, 128], strides = [1, 1]} : vector<8x512xf32> to vector<8x128xf32>
    %177 = math.tanh %176 : vector<8x128xf32>
    %178 = vector.extract_strided_slice %175 {offsets = [0, 0], sizes = [8, 128], strides = [1, 1]} : vector<8x384xf32> to vector<8x128xf32>
    %179 = vector.extract_strided_slice %175 {offsets = [0, 128], sizes = [8, 128], strides = [1, 1]} : vector<8x384xf32> to vector<8x128xf32>
    %180 = vector.extract_strided_slice %175 {offsets = [0, 256], sizes = [8, 128], strides = [1, 1]} : vector<8x384xf32> to vector<8x128xf32>
    %181 = arith.mulf %179, %158 : vector<8x128xf32>
    %182 = arith.mulf %178, %177 : vector<8x128xf32>
    %183 = arith.addf %181, %182 : vector<8x128xf32>
    %184 = math.tanh %183 : vector<8x128xf32>
    %185 = arith.mulf %180, %184 : vector<8x128xf32>
    %186 = arith.index_cast %c6_i32 : i32 to index
    %c0_51 = arith.constant 0 : index
    %c0_52 = arith.constant 0 : index
    %187 = vector.load %arg4[%186, %c0_51, %c0_52] : memref<8x8x128xf32, #tpu.memory_space<vmem>>, vector<1x8x128xf32>
    %188 = vector.shape_cast %187 : vector<1x8x128xf32> to vector<8x128xf32>
    %189 = vector.shape_cast %185 : vector<8x128xf32> to vector<1x8x128xf32>
    tpu.vector_store %arg4[%186, %c0_51, %c0_52], %189 {strides = array<i32>} : memref<8x8x128xf32, #tpu.memory_space<vmem>>, vector<1x8x128xf32>,
    %c7_i32 = arith.constant 7 : i32
    %190 = arith.index_cast %c7_i32 : i32 to index
    %c0_53 = arith.constant 0 : index
    %c0_54 = arith.constant 0 : index
    %191 = vector.load %arg6[%190, %c0_53, %c0_54] : memref<8x8x512xf32, #tpu.memory_space<vmem>>, vector<1x8x512xf32>
    %192 = vector.shape_cast %191 : vector<1x8x512xf32> to vector<8x512xf32>
    %cst_55 = arith.constant dense<0.000000e+00> : vector<8x512xf32>
    %193 = tpu.matmul %185, %12, %cst_55 {dimension_numbers = #tpu.dot_dimension_numbers<[1], [0], [0], [1], [0, 0, 1, 1], [], []>} : vector<8x128xf32>, vector<128x512xf32>, vector<8x512xf32> -> vector<8x512xf32>
    %194 = arith.addf %192, %193 : vector<8x512xf32>
    %195 = vector.extract_strided_slice %194 {offsets = [0, 0], sizes = [8, 384], strides = [1, 1]} : vector<8x512xf32> to vector<8x384xf32>
    %196 = arith.negf %195 : vector<8x384xf32>
    %197 = math.exp %196 : vector<8x384xf32>
    %cst_56 = arith.constant 1.000000e+00 : f32
    %198 = vector.broadcast %cst_56 : f32 to vector<8x384xf32>
    %199 = arith.addf %198, %197 : vector<8x384xf32>
    %200 = arith.divf %198, %199 : vector<8x384xf32>
    %201 = vector.extract_strided_slice %194 {offsets = [0, 384], sizes = [8, 128], strides = [1, 1]} : vector<8x512xf32> to vector<8x128xf32>
    %202 = math.tanh %201 : vector<8x128xf32>
    %203 = vector.extract_strided_slice %200 {offsets = [0, 0], sizes = [8, 128], strides = [1, 1]} : vector<8x384xf32> to vector<8x128xf32>
    %204 = vector.extract_strided_slice %200 {offsets = [0, 128], sizes = [8, 128], strides = [1, 1]} : vector<8x384xf32> to vector<8x128xf32>
    %205 = vector.extract_strided_slice %200 {offsets = [0, 256], sizes = [8, 128], strides = [1, 1]} : vector<8x384xf32> to vector<8x128xf32>
    %206 = arith.mulf %204, %183 : vector<8x128xf32>
    %207 = arith.mulf %203, %202 : vector<8x128xf32>
    %208 = arith.addf %206, %207 : vector<8x128xf32>
    %209 = math.tanh %208 : vector<8x128xf32>
    %210 = arith.mulf %205, %209 : vector<8x128xf32>
    %211 = arith.index_cast %c7_i32 : i32 to index
    %c0_57 = arith.constant 0 : index
    %c0_58 = arith.constant 0 : index
    %212 = vector.load %arg4[%211, %c0_57, %c0_58] : memref<8x8x128xf32, #tpu.memory_space<vmem>>, vector<1x8x128xf32>
    %213 = vector.shape_cast %212 : vector<1x8x128xf32> to vector<8x128xf32>
    %214 = vector.shape_cast %210 : vector<8x128xf32> to vector<1x8x128xf32>
    tpu.vector_store %arg4[%211, %c0_57, %c0_58], %214 {strides = array<i32>} : memref<8x8x128xf32, #tpu.memory_space<vmem>>, vector<1x8x128xf32>,
    %c8_i32 = arith.constant 8 : i32
    %c0_59 = arith.constant 0 : index
    %c0_60 = arith.constant 0 : index
    %215 = vector.load %arg5[%c0_59, %c0_60] : memref<8x128xf32, #tpu.memory_space<vmem>>, vector<8x128xf32>
    tpu.vector_store %arg5[%c0_59, %c0_60], %208 {strides = array<i32>} : memref<8x128xf32, #tpu.memory_space<vmem>>, vector<8x128xf32>,
    return
  }
}

</mosaic_0001>

<llo_original>
// kernel: encoder_forward.1
$region0: #{encoder_forward.1}
  #allocation0 [shape = 'u32[]', space=smem, size = 0x4, offset = 0x4, fixed_abs, tag = 'smem constant byte address 0x4 - core index']
  #allocation1 [shape = 'u32[144,128]{1,0:T(1,128)}', space=vmem, size = 0x12000, scoped, tag = 'internal scratch']
  #allocation2 [shape = 'f32[8,8,512]{2,1,0:T(8,128)}', space=vmem, size = 0x20000, scoped, tag = 'scratch operand']
  %s0 = inlined_call_operand.vmem [shape: f32[8,8], index: 0, kind: input, shape index: {}]
  %s1 = inlined_call_operand.vmem [shape: f32[1,512], index: 1, kind: input, shape index: {}]
  %s2 = inlined_call_operand.vmem [shape: f32[128,512], index: 2, kind: input, shape index: {}]
  %s3 = inlined_call_operand.vmem [shape: f32[1,512], index: 3, kind: input, shape index: {}]
  %s4 = inlined_call_operand.vmem [shape: f32[8,8,128], index: 4, kind: output, shape index: {0}]
  %s5 = inlined_call_operand.vmem [shape: f32[8,128], index: 5, kind: output, shape index: {1}]
  %6 = xla_tuple %s4, %s5
  %s7 = sld [smem:[#allocation0]]
  $region34: #{encoder_forward.1} parent=0
    _
  %s9 = ssub.s32 1, %s7
  %s10 = scalar_select 0, %s9, %s7
  // Predicated region
  $region2: #{encoder_forward.1} parent=0 // pred_check
    _
  $region3: #{encoder_forward.1} parent=0 // pred_check_branch
    %12 = sbr.rel (0) target = $region5
  $region4: #{encoder_forward.1} parent=0 // pred_region
    _
  $region5: #{encoder_forward.1} parent=0 // pred_fallthru
    _
  // Predicated region
  $region6: #{encoder_forward.1} parent=0 // pred_check
    _
  $region7: #{encoder_forward.1} parent=0 // pred_check_branch
    %14 = sbr.rel (0) target = $region9
  $region8: #{encoder_forward.1} parent=0 // pred_region
    _
  $region9: #{encoder_forward.1} parent=0 // pred_fallthru
    _
  // Predicated region
  $region10: #{encoder_forward.1} parent=0 // pred_check
    _
  $region11: #{encoder_forward.1} parent=0 // pred_check_branch
    %16 = sbr.rel (0) target = $region13
  $region12: #{encoder_forward.1} parent=0 // pred_region
    _
  $region13: #{encoder_forward.1} parent=0 // pred_fallthru
    _
  // Predicated region
  $region14: #{encoder_forward.1} parent=0 // pred_check
    _
  $region15: #{encoder_forward.1} parent=0 // pred_check_branch
    %18 = sbr.rel (0) target = $region17
  $region16: #{encoder_forward.1} parent=0 // pred_region
    _
  $region17: #{encoder_forward.1} parent=0 // pred_fallthru
    _
  %v19 = vld [vmem:[%s0] sm:$0xff]
  %v20 = vlaneseq
  %v21 = vshrl.u32 %v20, 7
  %v22 = vsub.s32 0, %v21
  %v23 = vrot.slane %v19, %v22
  %25 = vbcast.lane.b32.xlu0 %v23, 256
  %v26 = vpop.permute.xlu0 %25
  %v27 = vlaneseq
  %v28 = vshrl.u32 %v27, 7
  %v29 = vsub.s32 1, %v28
  %v30 = vrot.slane %v19, %v29
  %32 = vbcast.lane.b32.xlu0 %v30, 256
  %v33 = vpop.permute.xlu0 %32
  %v34 = vlaneseq
  %v35 = vshrl.u32 %v34, 7
  %v36 = vsub.s32 2, %v35
  %v37 = vrot.slane %v19, %v36
  %39 = vbcast.lane.b32.xlu0 %v37, 256
  %v40 = vpop.permute.xlu0 %39
  %v41 = vlaneseq
  %v42 = vshrl.u32 %v41, 7
  %v43 = vsub.s32 3, %v42
  %v44 = vrot.slane %v19, %v43
  %46 = vbcast.lane.b32.xlu0 %v44, 256
  %v47 = vpop.permute.xlu0 %46
  %v48 = vlaneseq
  %v49 = vshrl.u32 %v48, 7
  %v50 = vsub.s32 4, %v49
  %v51 = vrot.slane %v19, %v50
  %53 = vbcast.lane.b32.xlu0 %v51, 256
  %v54 = vpop.permute.xlu0 %53
  %v55 = vlaneseq
  %v56 = vshrl.u32 %v55, 7
  %v57 = vsub.s32 5, %v56
  %v58 = vrot.slane %v19, %v57
  %60 = vbcast.lane.b32.xlu0 %v58, 256
  %v61 = vpop.permute.xlu0 %60
  %v62 = vlaneseq
  %v63 = vshrl.u32 %v62, 7
  %v64 = vsub.s32 6, %v63
  %v65 = vrot.slane %v19, %v64
  %67 = vbcast.lane.b32.xlu0 %v65, 256
  %v68 = vpop.permute.xlu0 %67
  %v69 = vlaneseq
  %v70 = vshrl.u32 %v69, 7
  %v71 = vsub.s32 7, %v70
  %v72 = vrot.slane %v19, %v71
  %74 = vbcast.lane.b32.xlu0 %v72, 256
  %v75 = vpop.permute.xlu0 %74
  %v76 = vld [vmem:[%s1] sm:$0xf]
  %v78 = vlaneseq
  %v79 = vshrl.u32 %v78, 7
  %v80 = vsub.s32 0, %v79
  %v81 = vrot.slane %v76, %v80
  %v82 = vlaneseq
  %v83 = vshrl.u32 %v82, 7
  %v84 = vsub.s32 1, %v83
  %v85 = vrot.slane %v76, %v84
  %v86 = vlaneseq
  %v87 = vshrl.u32 %v86, 7
  %v88 = vsub.s32 2, %v87
  %v89 = vrot.slane %v76, %v88
  %v90 = vlaneseq
  %v91 = vshrl.u32 %v90, 7
  %v92 = vsub.s32 3, %v91
  %v93 = vrot.slane %v76, %v92
  %v98 = vmul.f32 %v26, %v81
  %v99 = vmul.f32 %v26, %v85
  %v100 = vmul.f32 %v26, %v89
  %v101 = vmul.f32 %v26, %v93
  %v102 = vmul.f32 %v33, %v81
  %v103 = vmul.f32 %v33, %v85
  %v104 = vmul.f32 %v33, %v89
  %v105 = vmul.f32 %v33, %v93
  %v106 = vmul.f32 %v40, %v81
  %v107 = vmul.f32 %v40, %v85
  %v108 = vmul.f32 %v40, %v89
  %v109 = vmul.f32 %v40, %v93
  %v110 = vmul.f32 %v47, %v81
  %v111 = vmul.f32 %v47, %v85
  %v112 = vmul.f32 %v47, %v89
  %v113 = vmul.f32 %v47, %v93
  %v114 = vmul.f32 %v54, %v81
  %v115 = vmul.f32 %v54, %v85
  %v116 = vmul.f32 %v54, %v89
  %v117 = vmul.f32 %v54, %v93
  %v118 = vmul.f32 %v61, %v81
  %v119 = vmul.f32 %v61, %v85
  %v120 = vmul.f32 %v61, %v89
  %v121 = vmul.f32 %v61, %v93
  %v122 = vmul.f32 %v68, %v81
  %v123 = vmul.f32 %v68, %v85
  %v124 = vmul.f32 %v68, %v89
  %v125 = vmul.f32 %v68, %v93
  %v126 = vmul.f32 %v75, %v81
  %v127 = vmul.f32 %v75, %v85
  %v128 = vmul.f32 %v75, %v89
  %v129 = vmul.f32 %v75, %v93
  %v130 = vld [vmem:[%s3] sm:$0xf]
  %v132 = vlaneseq
  %v133 = vshrl.u32 %v132, 7
  %v134 = vsub.s32 0, %v133
  %v135 = vrot.slane %v130, %v134
  %v136 = vlaneseq
  %v137 = vshrl.u32 %v136, 7
  %v138 = vsub.s32 1, %v137
  %v139 = vrot.slane %v130, %v138
  %v140 = vlaneseq
  %v141 = vshrl.u32 %v140, 7
  %v142 = vsub.s32 2, %v141
  %v143 = vrot.slane %v130, %v142
  %v144 = vlaneseq
  %v145 = vshrl.u32 %v144, 7
  %v146 = vsub.s32 3, %v145
  %v147 = vrot.slane %v130, %v146
  %v152 = vadd.f32 %v98, %v135
  %v153 = vadd.f32 %v99, %v139
  %v154 = vadd.f32 %v100, %v143
  %v155 = vadd.f32 %v101, %v147
  %v156 = vadd.f32 %v102, %v135
  %v157 = vadd.f32 %v103, %v139
  %v158 = vadd.f32 %v104, %v143
  %v159 = vadd.f32 %v105, %v147
  %v160 = vadd.f32 %v106, %v135
  %v161 = vadd.f32 %v107, %v139
  %v162 = vadd.f32 %v108, %v143
  %v163 = vadd.f32 %v109, %v147
  %v164 = vadd.f32 %v110, %v135
  %v165 = vadd.f32 %v111, %v139
  %v166 = vadd.f32 %v112, %v143
  %v167 = vadd.f32 %v113, %v147
  %v168 = vadd.f32 %v114, %v135
  %v169 = vadd.f32 %v115, %v139
  %v170 = vadd.f32 %v116, %v143
  %v171 = vadd.f32 %v117, %v147
  %v172 = vadd.f32 %v118, %v135
  %v173 = vadd.f32 %v119, %v139
  %v174 = vadd.f32 %v120, %v143
  %v175 = vadd.f32 %v121, %v147
  %v176 = vadd.f32 %v122, %v135
  %v177 = vadd.f32 %v123, %v139
  %v178 = vadd.f32 %v124, %v143
  %v179 = vadd.f32 %v125, %v147
  %v180 = vadd.f32 %v126, %v135
  %v181 = vadd.f32 %v127, %v139
  %v182 = vadd.f32 %v128, %v143
  %v183 = vadd.f32 %v129, %v147
  %184 = vst [vmem:[#allocation2] sm:$0xff] %v152
  %185 = vst [vmem:[#allocation2 + $0x8] sm:$0xff] %v153
  %186 = vst [vmem:[#allocation2 + $0x10] sm:$0xff] %v154
  %187 = vst [vmem:[#allocation2 + $0x18] sm:$0xff] %v155
  %188 = vst [vmem:[#allocation2 + $0x20] sm:$0xff] %v156
  %189 = vst [vmem:[#allocation2 + $0x28] sm:$0xff] %v157
  %190 = vst [vmem:[#allocation2 + $0x30] sm:$0xff] %v158
  %191 = vst [vmem:[#allocation2 + $0x38] sm:$0xff] %v159
  %192 = vst [vmem:[#allocation2 + $0x40] sm:$0xff] %v160
  %193 = vst [vmem:[#allocation2 + $0x48] sm:$0xff] %v161
  %194 = vst [vmem:[#allocation2 + $0x50] sm:$0xff] %v162
  %195 = vst [vmem:[#allocation2 + $0x58] sm:$0xff] %v163
  %196 = vst [vmem:[#allocation2 + $0x60] sm:$0xff] %v164
  %197 = vst [vmem:[#allocation2 + $0x68] sm:$0xff] %v165
  %198 = vst [vmem:[#allocation2 + $0x70] sm:$0xff] %v166
  %199 = vst [vmem:[#allocation2 + $0x78] sm:$0xff] %v167
  %200 = vst [vmem:[#allocation2 + $0x80] sm:$0xff] %v168
  %201 = vst [vmem:[#allocation2 + $0x88] sm:$0xff] %v169
  %202 = vst [vmem:[#allocation2 + $0x90] sm:$0xff] %v170
  %203 = vst [vmem:[#allocation2 + $0x98] sm:$0xff] %v171
  %204 = vst [vmem:[#allocation2 + $0xa0] sm:$0xff] %v172
  %205 = vst [vmem:[#allocation2 + $0xa8] sm:$0xff] %v173
  %206 = vst [vmem:[#allocation2 + $0xb0] sm:$0xff] %v174
  %207 = vst [vmem:[#allocation2 + $0xb8] sm:$0xff] %v175
  %208 = vst [vmem:[#allocation2 + $0xc0] sm:$0xff] %v176
  %209 = vst [vmem:[#allocation2 + $0xc8] sm:$0xff] %v177
  %210 = vst [vmem:[#allocation2 + $0xd0] sm:$0xff] %v178
  %211 = vst [vmem:[#allocation2 + $0xd8] sm:$0xff] %v179
  %212 = vst [vmem:[#allocation2 + $0xe0] sm:$0xff] %v180
  %213 = vst [vmem:[#allocation2 + $0xe8] sm:$0xff] %v181
  %214 = vst [vmem:[#allocation2 + $0xf0] sm:$0xff] %v182
  %215 = vst [vmem:[#allocation2 + $0xf8] sm:$0xff] %v183
  %v216 = vld [vmem:[%s2] sm:$0xff]
  %v217 = vld [vmem:[%s2 + $0x8] sm:$0xff]
  %v218 = vld [vmem:[%s2 + $0x10] sm:$0xff]
  %v219 = vld [vmem:[%s2 + $0x18] sm:$0xff]
  %v220 = vld [vmem:[%s2 + $0x20] sm:$0xff]
  %v221 = vld [vmem:[%s2 + $0x28] sm:$0xff]
  %v222 = vld [vmem:[%s2 + $0x30] sm:$0xff]
  %v223 = vld [vmem:[%s2 + $0x38] sm:$0xff]
  %v224 = vld [vmem:[%s2 + $0x40] sm:$0xff]
  %v225 = vld [vmem:[%s2 + $0x48] sm:$0xff]
  %v226 = vld [vmem:[%s2 + $0x50] sm:$0xff]
  %v227 = vld [vmem:[%s2 + $0x58] sm:$0xff]
  %v228 = vld [vmem:[%s2 + $0x60] sm:$0xff]
  %v229 = vld [vmem:[%s2 + $0x68] sm:$0xff]
  %v230 = vld [vmem:[%s2 + $0x70] sm:$0xff]
  %v231 = vld [vmem:[%s2 + $0x78] sm:$0xff]
  %v232 = vld [vmem:[%s2 + $0x80] sm:$0xff]
  %v233 = vld [vmem:[%s2 + $0x88] sm:$0xff]
  %v234 = vld [vmem:[%s2 + $0x90] sm:$0xff]
  %v235 = vld [vmem:[%s2 + $0x98] sm:$0xff]
  %v236 = vld [vmem:[%s2 + $0xa0] sm:$0xff]
  %v237 = vld [vmem:[%s2 + $0xa8] sm:$0xff]
  %v238 = vld [vmem:[%s2 + $0xb0] sm:$0xff]
  %v239 = vld [vmem:[%s2 + $0xb8] sm:$0xff]
  %v240 = vld [vmem:[%s2 + $0xc0] sm:$0xff]
  %v241 = vld [vmem:[%s2 + $0xc8] sm:$0xff]
  %v242 = vld [vmem:[%s2 + $0xd0] sm:$0xff]
  %v243 = vld [vmem:[%s2 + $0xd8] sm:$0xff]
  %v244 = vld [vmem:[%s2 + $0xe0] sm:$0xff]
  %v245 = vld [vmem:[%s2 + $0xe8] sm:$0xff]
  %v246 = vld [vmem:[%s2 + $0xf0] sm:$0xff]
  %v247 = vld [vmem:[%s2 + $0xf8] sm:$0xff]
  %v248 = vld [vmem:[%s2 + $0x100] sm:$0xff]
  %v249 = vld [vmem:[%s2 + $0x108] sm:$0xff]
  %v250 = vld [vmem:[%s2 + $0x110] sm:$0xff]
  %v251 = vld [vmem:[%s2 + $0x118] sm:$0xff]
  %v252 = vld [vmem:[%s2 + $0x120] sm:$0xff]
  %v253 = vld [vmem:[%s2 + $0x128] sm:$0xff]
  %v254 = vld [vmem:[%s2 + $0x130] sm:$0xff]
  %v255 = vld [vmem:[%s2 + $0x138] sm:$0xff]
  %v256 = vld [vmem:[%s2 + $0x140] sm:$0xff]
  %v257 = vld [vmem:[%s2 + $0x148] sm:$0xff]
  %v258 = vld [vmem:[%s2 + $0x150] sm:$0xff]
  %v259 = vld [vmem:[%s2 + $0x158] sm:$0xff]
  %v260 = vld [vmem:[%s2 + $0x160] sm:$0xff]
  %v261 = vld [vmem:[%s2 + $0x168] sm:$0xff]
  %v262 = vld [vmem:[%s2 + $0x170] sm:$0xff]
  %v263 = vld [vmem:[%s2 + $0x178] sm:$0xff]
  %v264 = vld [vmem:[%s2 + $0x180] sm:$0xff]
  %v265 = vld [vmem:[%s2 + $0x188] sm:$0xff]
  %v266 = vld [vmem:[%s2 + $0x190] sm:$0xff]
  %v267 = vld [vmem:[%s2 + $0x198] sm:$0xff]
  %v268 = vld [vmem:[%s2 + $0x1a0] sm:$0xff]
  %v269 = vld [vmem:[%s2 + $0x1a8] sm:$0xff]
  %v270 = vld [vmem:[%s2 + $0x1b0] sm:$0xff]
  %v271 = vld [vmem:[%s2 + $0x1b8] sm:$0xff]
  %v272 = vld [vmem:[%s2 + $0x1c0] sm:$0xff]
  %v273 = vld [vmem:[%s2 + $0x1c8] sm:$0xff]
  %v274 = vld [vmem:[%s2 + $0x1d0] sm:$0xff]
  %v275 = vld [vmem:[%s2 + $0x1d8] sm:$0xff]
  %v276 = vld [vmem:[%s2 + $0x1e0] sm:$0xff]
  %v277 = vld [vmem:[%s2 + $0x1e8] sm:$0xff]
  %v278 = vld [vmem:[%s2 + $0x1f0] sm:$0xff]
  %v279 = vld [vmem:[%s2 + $0x1f8] sm:$0xff]
  %v280 = vld [vmem:[#allocation2] sm:$0xff]
  %v281 = vld [vmem:[#allocation2 + $0x8] sm:$0xff]
  %v282 = vld [vmem:[#allocation2 + $0x10] sm:$0xff]
  %v283 = vld [vmem:[#allocation2 + $0x18] sm:$0xff]
  %284 = vmatprep.subr.mxu0 %v217
  %285 = vmatpush1.msra.mxu0 %v216
  %286 = vmatprep.subr.mxu0 %v221
  %287 = vmatpush1.msra.mxu0 %v220
  %288 = vmatprep.subr.mxu0 %v225
  %289 = vmatpush1.msra.mxu0 %v224
  %290 = vmatprep.subr.mxu0 %v229
  %291 = vmatpush1.msra.mxu0 %v228
  %292 = vmatprep.subr.mxu0 %v233
  %293 = vmatpush1.msra.mxu0 %v232
  %294 = vmatprep.subr.mxu0 %v237
  %295 = vmatpush1.msra.mxu0 %v236
  %296 = vmatprep.subr.mxu0 %v241
  %297 = vmatpush1.msra.mxu0 %v240
  %298 = vmatprep.subr.mxu0 %v245
  %299 = vmatpush1.msra.mxu0 %v244
  %300 = vmatprep.subr.mxu0 %v249
  %301 = vmatpush1.msra.mxu0 %v248
  %302 = vmatprep.subr.mxu0 %v253
  %303 = vmatpush1.msra.mxu0 %v252
  %304 = vmatprep.subr.mxu0 %v257
  %305 = vmatpush1.msra.mxu0 %v256
  %306 = vmatprep.subr.mxu0 %v261
  %307 = vmatpush1.msra.mxu0 %v260
  %308 = vmatprep.subr.mxu0 %v265
  %309 = vmatpush1.msra.mxu0 %v264
  %310 = vmatprep.subr.mxu0 %v269
  %311 = vmatpush1.msra.mxu0 %v268
  %312 = vmatprep.subr.mxu0 %v273
  %313 = vmatpush1.msra.mxu0 %v272
  %314 = vmatprep.subr.mxu0 %v277
  %315 = vmatpush1.msra.mxu0 %v276
  %316 = vmatprep.subr.mxu0 0.0
  %317 = vmatpush1.msra.mxu0 0.0
  %318 = vmatprep.subr.mxu0 0.0
  %319 = vmatpush1.msra.mxu0 0.0
  %320 = vmatprep.subr.mxu0 0.0
  %321 = vmatpush1.msra.mxu0 0.0
  %322 = vmatprep.subr.mxu0 0.0
  %323 = vmatpush1.msra.mxu0 0.0
  %324 = vmatprep.subr.mxu0 0.0
  %325 = vmatpush1.msra.mxu0 0.0
  %326 = vmatprep.subr.mxu0 0.0
  %327 = vmatpush1.msra.mxu0 0.0
  %328 = vmatprep.subr.mxu0 0.0
  %329 = vmatpush1.msra.mxu0 0.0
  %330 = vmatprep.subr.mxu0 0.0
  %331 = vmatpush1.msra.mxu0 0.0
  %332 = vmatprep.subr.mxu0 0.0
  %333 = vmatpush1.msra.mxu0 0.0
  %334 = vmatprep.subr.mxu0 0.0
  %335 = vmatpush1.msra.mxu0 0.0
  %336 = vmatprep.subr.mxu0 0.0
  %337 = vmatpush1.msra.mxu0 0.0
  %338 = vmatprep.subr.mxu0 0.0
  %339 = vmatpush1.msra.mxu0 0.0
  %340 = vmatprep.subr.mxu0 0.0
  %341 = vmatpush1.msra.mxu0 0.0
  %342 = vmatprep.subr.mxu0 0.0
  %343 = vmatpush1.msra.mxu0 0.0
  %344 = vmatprep.subr.mxu0 0.0
  %345 = vmatpush1.msra.mxu0 0.0
  %346 = vmatprep.subr.mxu0 0.0
  %347 = vmatpush1.msra.mxu0 0.0
  %348 = vmatprep.mubr.f32.mxu0 0.0
  %349 = vmatmul.mubr.f32.gmra.mrb[0].mxu0 0.0
  %v350 = vpop.f32.mrb[0].mxu0
  %v351 = vadd.f32 0.0, %v350
  %v352 = vpop.f32.mrb[0].mxu0
  %v353 = vadd.f32 0.0, %v352
  %354 = vdwg.mxu0
  %355 = vmatprep.subr.mxu0 %v219
  %356 = vmatpush1.msra.mxu0 %v218
  %357 = vmatprep.subr.mxu0 %v223
  %358 = vmatpush1.msra.mxu0 %v222
  %359 = vmatprep.subr.mxu0 %v227
  %360 = vmatpush1.msra.mxu0 %v226
  %361 = vmatprep.subr.mxu0 %v231
  %362 = vmatpush1.msra.mxu0 %v230
  %363 = vmatprep.subr.mxu0 %v235
  %364 = vmatpush1.msra.mxu0 %v234
  %365 = vmatprep.subr.mxu0 %v239
  %366 = vmatpush1.msra.mxu0 %v238
  %367 = vmatprep.subr.mxu0 %v243
  %368 = vmatpush1.msra.mxu0 %v242
  %369 = vmatprep.subr.mxu0 %v247
  %370 = vmatpush1.msra.mxu0 %v246
  %371 = vmatprep.subr.mxu0 %v251
  %372 = vmatpush1.msra.mxu0 %v250
  %373 = vmatprep.subr.mxu0 %v255
  %374 = vmatpush1.msra.mxu0 %v254
  %375 = vmatprep.subr.mxu0 %v259
  %376 = vmatpush1.msra.mxu0 %v258
  %377 = vmatprep.subr.mxu0 %v263
  %378 = vmatpush1.msra.mxu0 %v262
  %379 = vmatprep.subr.mxu0 %v267
  %380 = vmatpush1.msra.mxu0 %v266
  %381 = vmatprep.subr.mxu0 %v271
  %382 = vmatpush1.msra.mxu0 %v270
  %383 = vmatprep.subr.mxu0 %v275
  %384 = vmatpush1.msra.mxu0 %v274
  %385 = vmatprep.subr.mxu0 %v279
  %386 = vmatpush1.msra.mxu0 %v278
  %387 = vmatprep.subr.mxu0 0.0
  %388 = vmatpush1.msra.mxu0 0.0
  %389 = vmatprep.subr.mxu0 0.0
  %390 = vmatpush1.msra.mxu0 0.0
  %391 = vmatprep.subr.mxu0 0.0
  %392 = vmatpush1.msra.mxu0 0.0
  %393 = vmatprep.subr.mxu0 0.0
  %394 = vmatpush1.msra.mxu0 0.0
  %395 = vmatprep.subr.mxu0 0.0
  %396 = vmatpush1.msra.mxu0 0.0
  %397 = vmatprep.subr.mxu0 0.0
  %398 = vmatpush1.msra.mxu0 0.0
  %399 = vmatprep.subr.mxu0 0.0
  %400 = vmatpush1.msra.mxu0 0.0
  %401 = vmatprep.subr.mxu0 0.0
  %402 = vmatpush1.msra.mxu0 0.0
  %403 = vmatprep.subr.mxu0 0.0
  %404 = vmatpush1.msra.mxu0 0.0
  %405 = vmatprep.subr.mxu0 0.0
  %406 = vmatpush1.msra.mxu0 0.0
  %407 = vmatprep.subr.mxu0 0.0
  %408 = vmatpush1.msra.mxu0 0.0
  %409 = vmatprep.subr.mxu0 0.0
  %410 = vmatpush1.msra.mxu0 0.0
  %411 = vmatprep.subr.mxu0 0.0
  %412 = vmatpush1.msra.mxu0 0.0
  %413 = vmatprep.subr.mxu0 0.0
  %414 = vmatpush1.msra.mxu0 0.0
  %415 = vmatprep.subr.mxu0 0.0
  %416 = vmatpush1.msra.mxu0 0.0
  %417 = vmatprep.subr.mxu0 0.0
  %418 = vmatpush1.msra.mxu0 0.0
  %419 = vmatprep.mubr.f32.mxu0 0.0
  %420 = vmatmul.mubr.f32.gmra.mrb[0].mxu0 0.0
  %v421 = vpop.f32.mrb[0].mxu0
  %v422 = vadd.f32 0.0, %v421
  %v423 = vpop.f32.mrb[0].mxu0
  %v424 = vadd.f32 0.0, %v423
  %425 = vdwg.mxu0
  %v426 = vadd.f32 %v280, %v351
  %v427 = vadd.f32 %v281, %v353
  %v428 = vadd.f32 %v282, %v422
  %v429 = vadd.f32 %v283, %v424
  %v430 = vxor.u32 %v426, 2147483648
  %v431 = vxor.u32 %v427, 2147483648
  %v432 = vxor.u32 %v428, 2147483648
  %v433 = vmul.f32 %v430, 1.442695
  %v434 = vpow.pop %v433
  %v435 = vmul.f32 %v431, 1.442695
  %v436 = vpow.pop %v435
  %v437 = vmul.f32 %v432, 1.442695
  %v438 = vpow.pop %v437
  %v439 = vadd.f32 %v434, 1.0
  %v440 = vadd.f32 %v436, 1.0
  %v441 = vadd.f32 %v438, 1.0
  %v442 = vrcp.pop %v439
  %v443 = vmul.f32 1.0, %v442
  %v444 = vrcp.pop %v440
  %v445 = vmul.f32 1.0, %v444
  %v446 = vrcp.pop %v441
  %v447 = vmul.f32 1.0, %v446
  %v448 = vtanh.pop %v429
  %v449 = vmul.f32 %v445, 0.0
  %v450 = vmul.f32 %v443, %v448
  %v451 = vadd.f32 %v449, %v450
  %v452 = vtanh.pop %v451
  %v453 = vmul.f32 %v447, %v452
  %454 = vst [vmem:[%s4] sm:$0xff] %v453
  %s455 = scalar_lea.vmem [#allocation2], 32
  %v456 = vld [vmem:[%s455] sm:$0xff]
  %v457 = vld [vmem:[%s455 + $0x8] sm:$0xff]
  %v458 = vld [vmem:[%s455 + $0x10] sm:$0xff]
  %v459 = vld [vmem:[%s455 + $0x18] sm:$0xff]
  %460 = vmatprep.subr.mxu0 %v217
  %461 = vmatpush1.msra.mxu0 %v216
  %462 = vmatprep.subr.mxu0 %v221
  %463 = vmatpush1.msra.mxu0 %v220
  %464 = vmatprep.subr.mxu0 %v225
  %465 = vmatpush1.msra.mxu0 %v224
  %466 = vmatprep.subr.mxu0 %v229
  %467 = vmatpush1.msra.mxu0 %v228
  %468 = vmatprep.subr.mxu0 %v233
  %469 = vmatpush1.msra.mxu0 %v232
  %470 = vmatprep.subr.mxu0 %v237
  %471 = vmatpush1.msra.mxu0 %v236
  %472 = vmatprep.subr.mxu0 %v241
  %473 = vmatpush1.msra.mxu0 %v240
  %474 = vmatprep.subr.mxu0 %v245
  %475 = vmatpush1.msra.mxu0 %v244
  %476 = vmatprep.subr.mxu0 %v249
  %477 = vmatpush1.msra.mxu0 %v248
  %478 = vmatprep.subr.mxu0 %v253
  %479 = vmatpush1.msra.mxu0 %v252
  %480 = vmatprep.subr.mxu0 %v257
  %481 = vmatpush1.msra.mxu0 %v256
  %482 = vmatprep.subr.mxu0 %v261
  %483 = vmatpush1.msra.mxu0 %v260
  %484 = vmatprep.subr.mxu0 %v265
  %485 = vmatpush1.msra.mxu0 %v264
  %486 = vmatprep.subr.mxu0 %v269
  %487 = vmatpush1.msra.mxu0 %v268
  %488 = vmatprep.subr.mxu0 %v273
  %489 = vmatpush1.msra.mxu0 %v272
  %490 = vmatprep.subr.mxu0 %v277
  %491 = vmatpush1.msra.mxu0 %v276
  %492 = vmatprep.subr.mxu0 0.0
  %493 = vmatpush1.msra.mxu0 0.0
  %494 = vmatprep.subr.mxu0 0.0
  %495 = vmatpush1.msra.mxu0 0.0
  %496 = vmatprep.subr.mxu0 0.0
  %497 = vmatpush1.msra.mxu0 0.0
  %498 = vmatprep.subr.mxu0 0.0
  %499 = vmatpush1.msra.mxu0 0.0
  %500 = vmatprep.subr.mxu0 0.0
  %501 = vmatpush1.msra.mxu0 0.0
  %502 = vmatprep.subr.mxu0 0.0
  %503 = vmatpush1.msra.mxu0 0.0
  %504 = vmatprep.subr.mxu0 0.0
  %505 = vmatpush1.msra.mxu0 0.0
  %506 = vmatprep.subr.mxu0 0.0
  %507 = vmatpush1.msra.mxu0 0.0
  %508 = vmatprep.subr.mxu0 0.0
  %509 = vmatpush1.msra.mxu0 0.0
  %510 = vmatprep.subr.mxu0 0.0
  %511 = vmatpush1.msra.mxu0 0.0
  %512 = vmatprep.subr.mxu0 0.0
  %513 = vmatpush1.msra.mxu0 0.0
  %514 = vmatprep.subr.mxu0 0.0
  %515 = vmatpush1.msra.mxu0 0.0
  %516 = vmatprep.subr.mxu0 0.0
  %517 = vmatpush1.msra.mxu0 0.0
  %518 = vmatprep.subr.mxu0 0.0
  %519 = vmatpush1.msra.mxu0 0.0
  %520 = vmatprep.subr.mxu0 0.0
  %521 = vmatpush1.msra.mxu0 0.0
  %522 = vmatprep.subr.mxu0 0.0
  %523 = vmatpush1.msra.mxu0 0.0
  %524 = vmatprep.mubr.f32.mxu0 0.0
  %525 = vmatmul.mubr.f32.gmra.mrb[0].mxu0 %v453
  %v526 = vpop.f32.mrb[0].mxu0
  %v527 = vadd.f32 0.0, %v526
  %v528 = vpop.f32.mrb[0].mxu0
  %v529 = vadd.f32 0.0, %v528
  %530 = vdwg.mxu0
  %531 = vmatprep.subr.mxu0 %v219
  %532 = vmatpush1.msra.mxu0 %v218
  %533 = vmatprep.subr.mxu0 %v223
  %534 = vmatpush1.msra.mxu0 %v222
  %535 = vmatprep.subr.mxu0 %v227
  %536 = vmatpush1.msra.mxu0 %v226
  %537 = vmatprep.subr.mxu0 %v231
  %538 = vmatpush1.msra.mxu0 %v230
  %539 = vmatprep.subr.mxu0 %v235
  %540 = vmatpush1.msra.mxu0 %v234
  %541 = vmatprep.subr.mxu0 %v239
  %542 = vmatpush1.msra.mxu0 %v238
  %543 = vmatprep.subr.mxu0 %v243
  %544 = vmatpush1.msra.mxu0 %v242
  %545 = vmatprep.subr.mxu0 %v247
  %546 = vmatpush1.msra.mxu0 %v246
  %547 = vmatprep.subr.mxu0 %v251
  %548 = vmatpush1.msra.mxu0 %v250
  %549 = vmatprep.subr.mxu0 %v255
  %550 = vmatpush1.msra.mxu0 %v254
  %551 = vmatprep.subr.mxu0 %v259
  %552 = vmatpush1.msra.mxu0 %v258
  %553 = vmatprep.subr.mxu0 %v263
  %554 = vmatpush1.msra.mxu0 %v262
  %555 = vmatprep.subr.mxu0 %v267
  %556 = vmatpush1.msra.mxu0 %v266
  %557 = vmatprep.subr.mxu0 %v271
  %558 = vmatpush1.msra.mxu0 %v270
  %559 = vmatprep.subr.mxu0 %v275
  %560 = vmatpush1.msra.mxu0 %v274
  %561 = vmatprep.subr.mxu0 %v279
  %562 = vmatpush1.msra.mxu0 %v278
  %563 = vmatprep.subr.mxu0 0.0
  %564 = vmatpush1.msra.mxu0 0.0
  %565 = vmatprep.subr.mxu0 0.0
  %566 = vmatpush1.msra.mxu0 0.0
  %567 = vmatprep.subr.mxu0 0.0
  %568 = vmatpush1.msra.mxu0 0.0
  %569 = vmatprep.subr.mxu0 0.0
  %570 = vmatpush1.msra.mxu0 0.0
  %571 = vmatprep.subr.mxu0 0.0
  %572 = vmatpush1.msra.mxu0 0.0
  %573 = vmatprep.subr.mxu0 0.0
  %574 = vmatpush1.msra.mxu0 0.0
  %575 = vmatprep.subr.mxu0 0.0
  %576 = vmatpush1.msra.mxu0 0.0
  %577 = vmatprep.subr.mxu0 0.0
  %578 = vmatpush1.msra.mxu0 0.0
  %579 = vmatprep.subr.mxu0 0.0
  %580 = vmatpush1.msra.mxu0 0.0
  %581 = vmatprep.subr.mxu0 0.0
  %582 = vmatpush1.msra.mxu0 0.0
  %583 = vmatprep.subr.mxu0 0.0
  %584 = vmatpush1.msra.mxu0 0.0
  %585 = vmatprep.subr.mxu0 0.0
  %586 = vmatpush1.msra.mxu0 0.0
  %587 = vmatprep.subr.mxu0 0.0
  %588 = vmatpush1.msra.mxu0 0.0
  %589 = vmatprep.subr.mxu0 0.0
  %590 = vmatpush1.msra.mxu0 0.0
  %591 = vmatprep.subr.mxu0 0.0
  %592 = vmatpush1.msra.mxu0 0.0
  %593 = vmatprep.subr.mxu0 0.0
  %594 = vmatpush1.msra.mxu0 0.0
  %595 = vmatprep.mubr.f32.mxu0 0.0
  %596 = vmatmul.mubr.f32.gmra.mrb[0].mxu0 %v453
  %v597 = vpop.f32.mrb[0].mxu0
  %v598 = vadd.f32 0.0, %v597
  %v599 = vpop.f32.mrb[0].mxu0
  %v600 = vadd.f32 0.0, %v599
  %601 = vdwg.mxu0
  %v602 = vadd.f32 %v456, %v527
  %v603 = vadd.f32 %v457, %v529
  %v604 = vadd.f32 %v458, %v598
  %v605 = vadd.f32 %v459, %v600
  %v606 = vxor.u32 %v602, 2147483648
  %v607 = vxor.u32 %v603, 2147483648
  %v608 = vxor.u32 %v604, 2147483648
  %v609 = vmul.f32 %v606, 1.442695
  %v610 = vpow.pop %v609
  %v611 = vmul.f32 %v607, 1.442695
  %v612 = vpow.pop %v611
  %v613 = vmul.f32 %v608, 1.442695
  %v614 = vpow.pop %v613
  %v615 = vadd.f32 %v610, 1.0
  %v616 = vadd.f32 %v612, 1.0
  %v617 = vadd.f32 %v614, 1.0
  %v618 = vrcp.pop %v615
  %v619 = vmul.f32 1.0, %v618
  %v620 = vrcp.pop %v616
  %v621 = vmul.f32 1.0, %v620
  %v622 = vrcp.pop %v617
  %v623 = vmul.f32 1.0, %v622
  %v624 = vtanh.pop %v605
  %v625 = vmul.f32 %v621, %v451
  %v626 = vmul.f32 %v619, %v624
  %v627 = vadd.f32 %v625, %v626
  %v628 = vtanh.pop %v627
  %v629 = vmul.f32 %v623, %v628
  %s630 = scalar_lea.vmem %s4, 8
  %631 = vst [vmem:[%s630] sm:$0xff] %v629
  %s632 = scalar_lea.vmem [#allocation2], 64
  %v633 = vld [vmem:[%s632] sm:$0xff]
  %v634 = vld [vmem:[%s632 + $0x8] sm:$0xff]
  %v635 = vld [vmem:[%s632 + $0x10] sm:$0xff]
  %v636 = vld [vmem:[%s632 + $0x18] sm:$0xff]
  %637 = vmatprep.subr.mxu0 %v217
  %638 = vmatpush1.msra.mxu0 %v216
  %639 = vmatprep.subr.mxu0 %v221
  %640 = vmatpush1.msra.mxu0 %v220
  %641 = vmatprep.subr.mxu0 %v225
  %642 = vmatpush1.msra.mxu0 %v224
  %643 = vmatprep.subr.mxu0 %v229
  %644 = vmatpush1.msra.mxu0 %v228
  %645 = vmatprep.subr.mxu0 %v233
  %646 = vmatpush1.msra.mxu0 %v232
  %647 = vmatprep.subr.mxu0 %v237
  %648 = vmatpush1.msra.mxu0 %v236
  %649 = vmatprep.subr.mxu0 %v241
  %650 = vmatpush1.msra.mxu0 %v240
  %651 = vmatprep.subr.mxu0 %v245
  %652 = vmatpush1.msra.mxu0 %v244
  %653 = vmatprep.subr.mxu0 %v249
  %654 = vmatpush1.msra.mxu0 %v248
  %655 = vmatprep.subr.mxu0 %v253
  %656 = vmatpush1.msra.mxu0 %v252
  %657 = vmatprep.subr.mxu0 %v257
  %658 = vmatpush1.msra.mxu0 %v256
  %659 = vmatprep.subr.mxu0 %v261
  %660 = vmatpush1.msra.mxu0 %v260
  %661 = vmatprep.subr.mxu0 %v265
  %662 = vmatpush1.msra.mxu0 %v264
  %663 = vmatprep.subr.mxu0 %v269
  %664 = vmatpush1.msra.mxu0 %v268
  %665 = vmatprep.subr.mxu0 %v273
  %666 = vmatpush1.msra.mxu0 %v272
  %667 = vmatprep.subr.mxu0 %v277
  %668 = vmatpush1.msra.mxu0 %v276
  %669 = vmatprep.subr.mxu0 0.0
  %670 = vmatpush1.msra.mxu0 0.0
  %671 = vmatprep.subr.mxu0 0.0
  %672 = vmatpush1.msra.mxu0 0.0
  %673 = vmatprep.subr.mxu0 0.0
  %674 = vmatpush1.msra.mxu0 0.0
  %675 = vmatprep.subr.mxu0 0.0
  %676 = vmatpush1.msra.mxu0 0.0
  %677 = vmatprep.subr.mxu0 0.0
  %678 = vmatpush1.msra.mxu0 0.0
  %679 = vmatprep.subr.mxu0 0.0
  %680 = vmatpush1.msra.mxu0 0.0
  %681 = vmatprep.subr.mxu0 0.0
  %682 = vmatpush1.msra.mxu0 0.0
  %683 = vmatprep.subr.mxu0 0.0
  %684 = vmatpush1.msra.mxu0 0.0
  %685 = vmatprep.subr.mxu0 0.0
  %686 = vmatpush1.msra.mxu0 0.0
  %687 = vmatprep.subr.mxu0 0.0
  %688 = vmatpush1.msra.mxu0 0.0
  %689 = vmatprep.subr.mxu0 0.0
  %690 = vmatpush1.msra.mxu0 0.0
  %691 = vmatprep.subr.mxu0 0.0
  %692 = vmatpush1.msra.mxu0 0.0
  %693 = vmatprep.subr.mxu0 0.0
  %694 = vmatpush1.msra.mxu0 0.0
  %695 = vmatprep.subr.mxu0 0.0
  %696 = vmatpush1.msra.mxu0 0.0
  %697 = vmatprep.subr.mxu0 0.0
  %698 = vmatpush1.msra.mxu0 0.0
  %699 = vmatprep.subr.mxu0 0.0
  %700 = vmatpush1.msra.mxu0 0.0
  %701 = vmatprep.mubr.f32.mxu0 0.0
  %702 = vmatmul.mubr.f32.gmra.mrb[0].mxu0 %v629
  %v703 = vpop.f32.mrb[0].mxu0
  %v704 = vadd.f32 0.0, %v703
  %v705 = vpop.f32.mrb[0].mxu0
  %v706 = vadd.f32 0.0, %v705
  %707 = vdwg.mxu0
  %708 = vmatprep.subr.mxu0 %v219
  %709 = vmatpush1.msra.mxu0 %v218
  %710 = vmatprep.subr.mxu0 %v223
  %711 = vmatpush1.msra.mxu0 %v222
  %712 = vmatprep.subr.mxu0 %v227
  %713 = vmatpush1.msra.mxu0 %v226
  %714 = vmatprep.subr.mxu0 %v231
  %715 = vmatpush1.msra.mxu0 %v230
  %716 = vmatprep.subr.mxu0 %v235
  %717 = vmatpush1.msra.mxu0 %v234
  %718 = vmatprep.subr.mxu0 %v239
  %719 = vmatpush1.msra.mxu0 %v238
  %720 = vmatprep.subr.mxu0 %v243
  %721 = vmatpush1.msra.mxu0 %v242
  %722 = vmatprep.subr.mxu0 %v247
  %723 = vmatpush1.msra.mxu0 %v246
  %724 = vmatprep.subr.mxu0 %v251
  %725 = vmatpush1.msra.mxu0 %v250
  %726 = vmatprep.subr.mxu0 %v255
  %727 = vmatpush1.msra.mxu0 %v254
  %728 = vmatprep.subr.mxu0 %v259
  %729 = vmatpush1.msra.mxu0 %v258
  %730 = vmatprep.subr.mxu0 %v263
  %731 = vmatpush1.msra.mxu0 %v262
  %732 = vmatprep.subr.mxu0 %v267
  %733 = vmatpush1.msra.mxu0 %v266
  %734 = vmatprep.subr.mxu0 %v271
  %735 = vmatpush1.msra.mxu0 %v270
  %736 = vmatprep.subr.mxu0 %v275
  %737 = vmatpush1.msra.mxu0 %v274
  %738 = vmatprep.subr.mxu0 %v279
  %739 = vmatpush1.msra.mxu0 %v278
  %740 = vmatprep.subr.mxu0 0.0
  %741 = vmatpush1.msra.mxu0 0.0
  %742 = vmatprep.subr.mxu0 0.0
  %743 = vmatpush1.msra.mxu0 0.0
  %744 = vmatprep.subr.mxu0 0.0
  %745 = vmatpush1.msra.mxu0 0.0
  %746 = vmatprep.subr.mxu0 0.0
  %747 = vmatpush1.msra.mxu0 0.0
  %748 = vmatprep.subr.mxu0 0.0
  %749 = vmatpush1.msra.mxu0 0.0
  %750 = vmatprep.subr.mxu0 0.0
  %751 = vmatpush1.msra.mxu0 0.0
  %752 = vmatprep.subr.mxu0 0.0
  %753 = vmatpush1.msra.mxu0 0.0
  %754 = vmatprep.subr.mxu0 0.0
  %755 = vmatpush1.msra.mxu0 0.0
  %756 = vmatprep.subr.mxu0 0.0
  %757 = vmatpush1.msra.mxu0 0.0
  %758 = vmatprep.subr.mxu0 0.0
  %759 = vmatpush1.msra.mxu0 0.0
  %760 = vmatprep.subr.mxu0 0.0
  %761 = vmatpush1.msra.mxu0 0.0
  %762 = vmatprep.subr.mxu0 0.0
  %763 = vmatpush1.msra.mxu0 0.0
  %764 = vmatprep.subr.mxu0 0.0
  %765 = vmatpush1.msra.mxu0 0.0
  %766 = vmatprep.subr.mxu0 0.0
  %767 = vmatpush1.msra.mxu0 0.0
  %768 = vmatprep.subr.mxu0 0.0
  %769 = vmatpush1.msra.mxu0 0.0
  %770 = vmatprep.subr.mxu0 0.0
  %771 = vmatpush1.msra.mxu0 0.0
  %772 = vmatprep.mubr.f32.mxu0 0.0
  %773 = vmatmul.mubr.f32.gmra.mrb[0].mxu0 %v629
  %v774 = vpop.f32.mrb[0].mxu0
  %v775 = vadd.f32 0.0, %v774
  %v776 = vpop.f32.mrb[0].mxu0
  %v777 = vadd.f32 0.0, %v776
  %778 = vdwg.mxu0
  %v779 = vadd.f32 %v633, %v704
  %v780 = vadd.f32 %v634, %v706
  %v781 = vadd.f32 %v635, %v775
  %v782 = vadd.f32 %v636, %v777
  %v783 = vxor.u32 %v779, 2147483648
  %v784 = vxor.u32 %v780, 2147483648
  %v785 = vxor.u32 %v781, 2147483648
  %v786 = vmul.f32 %v783, 1.442695
  %v787 = vpow.pop %v786
  %v788 = vmul.f32 %v784, 1.442695
  %v789 = vpow.pop %v788
  %v790 = vmul.f32 %v785, 1.442695
  %v791 = vpow.pop %v790
  %v792 = vadd.f32 %v787, 1.0
  %v793 = vadd.f32 %v789, 1.0
  %v794 = vadd.f32 %v791, 1.0
  %v795 = vrcp.pop %v792
  %v796 = vmul.f32 1.0, %v795
  %v797 = vrcp.pop %v793
  %v798 = vmul.f32 1.0, %v797
  %v799 = vrcp.pop %v794
  %v800 = vmul.f32 1.0, %v799
  %v801 = vtanh.pop %v782
  %v802 = vmul.f32 %v798, %v627
  %v803 = vmul.f32 %v796, %v801
  %v804 = vadd.f32 %v802, %v803
  %v805 = vtanh.pop %v804
  %v806 = vmul.f32 %v800, %v805
  %s807 = scalar_lea.vmem %s4, 16
  %808 = vst [vmem:[%s807] sm:$0xff] %v806
  %s809 = scalar_lea.vmem [#allocation2], 96
  %v810 = vld [vmem:[%s809] sm:$0xff]
  %v811 = vld [vmem:[%s809 + $0x8] sm:$0xff]
  %v812 = vld [vmem:[%s809 + $0x10] sm:$0xff]
  %v813 = vld [vmem:[%s809 + $0x18] sm:$0xff]
  %814 = vmatprep.subr.mxu0 %v217
  %815 = vmatpush1.msra.mxu0 %v216
  %816 = vmatprep.subr.mxu0 %v221
  %817 = vmatpush1.msra.mxu0 %v220
  %818 = vmatprep.subr.mxu0 %v225
  %819 = vmatpush1.msra.mxu0 %v224
  %820 = vmatprep.subr.mxu0 %v229
  %821 = vmatpush1.msra.mxu0 %v228
  %822 = vmatprep.subr.mxu0 %v233
  %823 = vmatpush1.msra.mxu0 %v232
  %824 = vmatprep.subr.mxu0 %v237
  %825 = vmatpush1.msra.mxu0 %v236
  %826 = vmatprep.subr.mxu0 %v241
  %827 = vmatpush1.msra.mxu0 %v240
  %828 = vmatprep.subr.mxu0 %v245
  %829 = vmatpush1.msra.mxu0 %v244
  %830 = vmatprep.subr.mxu0 %v249
  %831 = vmatpush1.msra.mxu0 %v248
  %832 = vmatprep.subr.mxu0 %v253
  %833 = vmatpush1.msra.mxu0 %v252
  %834 = vmatprep.subr.mxu0 %v257
  %835 = vmatpush1.msra.mxu0 %v256
  %836 = vmatprep.subr.mxu0 %v261
  %837 = vmatpush1.msra.mxu0 %v260
  %838 = vmatprep.subr.mxu0 %v265
  %839 = vmatpush1.msra.mxu0 %v264
  %840 = vmatprep.subr.mxu0 %v269
  %841 = vmatpush1.msra.mxu0 %v268
  %842 = vmatprep.subr.mxu0 %v273
  %843 = vmatpush1.msra.mxu0 %v272
  %844 = vmatprep.subr.mxu0 %v277
  %845 = vmatpush1.msra.mxu0 %v276
  %846 = vmatprep.subr.mxu0 0.0
  %847 = vmatpush1.msra.mxu0 0.0
  %848 = vmatprep.subr.mxu0 0.0
  %849 = vmatpush1.msra.mxu0 0.0
  %850 = vmatprep.subr.mxu0 0.0
  %851 = vmatpush1.msra.mxu0 0.0
  %852 = vmatprep.subr.mxu0 0.0
  %853 = vmatpush1.msra.mxu0 0.0
  %854 = vmatprep.subr.mxu0 0.0
  %855 = vmatpush1.msra.mxu0 0.0
  %856 = vmatprep.subr.mxu0 0.0
  %857 = vmatpush1.msra.mxu0 0.0
  %858 = vmatprep.subr.mxu0 0.0
  %859 = vmatpush1.msra.mxu0 0.0
  %860 = vmatprep.subr.mxu0 0.0
  %861 = vmatpush1.msra.mxu0 0.0
  %862 = vmatprep.subr.mxu0 0.0
  %863 = vmatpush1.msra.mxu0 0.0
  %864 = vmatprep.subr.mxu0 0.0
  %865 = vmatpush1.msra.mxu0 0.0
  %866 = vmatprep.subr.mxu0 0.0
  %867 = vmatpush1.msra.mxu0 0.0
  %868 = vmatprep.subr.mxu0 0.0
  %869 = vmatpush1.msra.mxu0 0.0
  %870 = vmatprep.subr.mxu0 0.0
  %871 = vmatpush1.msra.mxu0 0.0
  %872 = vmatprep.subr.mxu0 0.0
  %873 = vmatpush1.msra.mxu0 0.0
  %874 = vmatprep.subr.mxu0 0.0
  %875 = vmatpush1.msra.mxu0 0.0
  %876 = vmatprep.subr.mxu0 0.0
  %877 = vmatpush1.msra.mxu0 0.0
  %878 = vmatprep.mubr.f32.mxu0 0.0
  %879 = vmatmul.mubr.f32.gmra.mrb[0].mxu0 %v806
  %v880 = vpop.f32.mrb[0].mxu0
  %v881 = vadd.f32 0.0, %v880
  %v882 = vpop.f32.mrb[0].mxu0
  %v883 = vadd.f32 0.0, %v882
  %884 = vdwg.mxu0
  %885 = vmatprep.subr.mxu0 %v219
  %886 = vmatpush1.msra.mxu0 %v218
  %887 = vmatprep.subr.mxu0 %v223
  %888 = vmatpush1.msra.mxu0 %v222
  %889 = vmatprep.subr.mxu0 %v227
  %890 = vmatpush1.msra.mxu0 %v226
  %891 = vmatprep.subr.mxu0 %v231
  %892 = vmatpush1.msra.mxu0 %v230
  %893 = vmatprep.subr.mxu0 %v235
  %894 = vmatpush1.msra.mxu0 %v234
  %895 = vmatprep.subr.mxu0 %v239
  %896 = vmatpush1.msra.mxu0 %v238
  %897 = vmatprep.subr.mxu0 %v243
  %898 = vmatpush1.msra.mxu0 %v242
  %899 = vmatprep.subr.mxu0 %v247
  %900 = vmatpush1.msra.mxu0 %v246
  %901 = vmatprep.subr.mxu0 %v251
  %902 = vmatpush1.msra.mxu0 %v250
  %903 = vmatprep.subr.mxu0 %v255
  %904 = vmatpush1.msra.mxu0 %v254
  %905 = vmatprep.subr.mxu0 %v259
  %906 = vmatpush1.msra.mxu0 %v258
  %907 = vmatprep.subr.mxu0 %v263
  %908 = vmatpush1.msra.mxu0 %v262
  %909 = vmatprep.subr.mxu0 %v267
  %910 = vmatpush1.msra.mxu0 %v266
  %911 = vmatprep.subr.mxu0 %v271
  %912 = vmatpush1.msra.mxu0 %v270
  %913 = vmatprep.subr.mxu0 %v275
  %914 = vmatpush1.msra.mxu0 %v274
  %915 = vmatprep.subr.mxu0 %v279
  %916 = vmatpush1.msra.mxu0 %v278
  %917 = vmatprep.subr.mxu0 0.0
  %918 = vmatpush1.msra.mxu0 0.0
  %919 = vmatprep.subr.mxu0 0.0
  %920 = vmatpush1.msra.mxu0 0.0
  %921 = vmatprep.subr.mxu0 0.0
  %922 = vmatpush1.msra.mxu0 0.0
  %923 = vmatprep.subr.mxu0 0.0
  %924 = vmatpush1.msra.mxu0 0.0
  %925 = vmatprep.subr.mxu0 0.0
  %926 = vmatpush1.msra.mxu0 0.0
  %927 = vmatprep.subr.mxu0 0.0
  %928 = vmatpush1.msra.mxu0 0.0
  %929 = vmatprep.subr.mxu0 0.0
  %930 = vmatpush1.msra.mxu0 0.0
  %931 = vmatprep.subr.mxu0 0.0
  %932 = vmatpush1.msra.mxu0 0.0
  %933 = vmatprep.subr.mxu0 0.0
  %934 = vmatpush1.msra.mxu0 0.0
  %935 = vmatprep.subr.mxu0 0.0
  %936 = vmatpush1.msra.mxu0 0.0
  %937 = vmatprep.subr.mxu0 0.0
  %938 = vmatpush1.msra.mxu0 0.0
  %939 = vmatprep.subr.mxu0 0.0
  %940 = vmatpush1.msra.mxu0 0.0
  %941 = vmatprep.subr.mxu0 0.0
  %942 = vmatpush1.msra.mxu0 0.0
  %943 = vmatprep.subr.mxu0 0.0
  %944 = vmatpush1.msra.mxu0 0.0
  %945 = vmatprep.subr.mxu0 0.0
  %946 = vmatpush1.msra.mxu0 0.0
  %947 = vmatprep.subr.mxu0 0.0
  %948 = vmatpush1.msra.mxu0 0.0
  %949 = vmatprep.mubr.f32.mxu0 0.0
  %950 = vmatmul.mubr.f32.gmra.mrb[0].mxu0 %v806
  %v951 = vpop.f32.mrb[0].mxu0
  %v952 = vadd.f32 0.0, %v951
  %v953 = vpop.f32.mrb[0].mxu0
  %v954 = vadd.f32 0.0, %v953
  %955 = vdwg.mxu0
  %v956 = vadd.f32 %v810, %v881
  %v957 = vadd.f32 %v811, %v883
  %v958 = vadd.f32 %v812, %v952
  %v959 = vadd.f32 %v813, %v954
  %v960 = vxor.u32 %v956, 2147483648
  %v961 = vxor.u32 %v957, 2147483648
  %v962 = vxor.u32 %v958, 2147483648
  %v963 = vmul.f32 %v960, 1.442695
  %v964 = vpow.pop %v963
  %v965 = vmul.f32 %v961, 1.442695
  %v966 = vpow.pop %v965
  %v967 = vmul.f32 %v962, 1.442695
  %v968 = vpow.pop %v967
  %v969 = vadd.f32 %v964, 1.0
  %v970 = vadd.f32 %v966, 1.0
  %v971 = vadd.f32 %v968, 1.0
  %v972 = vrcp.pop %v969
  %v973 = vmul.f32 1.0, %v972
  %v974 = vrcp.pop %v970
  %v975 = vmul.f32 1.0, %v974
  %v976 = vrcp.pop %v971
  %v977 = vmul.f32 1.0, %v976
  %v978 = vtanh.pop %v959
  %v979 = vmul.f32 %v975, %v804
  %v980 = vmul.f32 %v973, %v978
  %v981 = vadd.f32 %v979, %v980
  %v982 = vtanh.pop %v981
  %v983 = vmul.f32 %v977, %v982
  %s984 = scalar_lea.vmem %s4, 24
  %985 = vst [vmem:[%s984] sm:$0xff] %v983
  %s986 = scalar_lea.vmem [#allocation2], 128
  %v987 = vld [vmem:[%s986] sm:$0xff]
  %v988 = vld [vmem:[%s986 + $0x8] sm:$0xff]
  %v989 = vld [vmem:[%s986 + $0x10] sm:$0xff]
  %v990 = vld [vmem:[%s986 + $0x18] sm:$0xff]
  %991 = vmatprep.subr.mxu0 %v217
  %992 = vmatpush1.msra.mxu0 %v216
  %993 = vmatprep.subr.mxu0 %v221
  %994 = vmatpush1.msra.mxu0 %v220
  %995 = vmatprep.subr.mxu0 %v225
  %996 = vmatpush1.msra.mxu0 %v224
  %997 = vmatprep.subr.mxu0 %v229
  %998 = vmatpush1.msra.mxu0 %v228
  %999 = vmatprep.subr.mxu0 %v233
  %1000 = vmatpush1.msra.mxu0 %v232
  %1001 = vmatprep.subr.mxu0 %v237
  %1002 = vmatpush1.msra.mxu0 %v236
  %1003 = vmatprep.subr.mxu0 %v241
  %1004 = vmatpush1.msra.mxu0 %v240
  %1005 = vmatprep.subr.mxu0 %v245
  %1006 = vmatpush1.msra.mxu0 %v244
  %1007 = vmatprep.subr.mxu0 %v249
  %1008 = vmatpush1.msra.mxu0 %v248
  %1009 = vmatprep.subr.mxu0 %v253
  %1010 = vmatpush1.msra.mxu0 %v252
  %1011 = vmatprep.subr.mxu0 %v257
  %1012 = vmatpush1.msra.mxu0 %v256
  %1013 = vmatprep.subr.mxu0 %v261
  %1014 = vmatpush1.msra.mxu0 %v260
  %1015 = vmatprep.subr.mxu0 %v265
  %1016 = vmatpush1.msra.mxu0 %v264
  %1017 = vmatprep.subr.mxu0 %v269
  %1018 = vmatpush1.msra.mxu0 %v268
  %1019 = vmatprep.subr.mxu0 %v273
  %1020 = vmatpush1.msra.mxu0 %v272
  %1021 = vmatprep.subr.mxu0 %v277
  %1022 = vmatpush1.msra.mxu0 %v276
  %1023 = vmatprep.subr.mxu0 0.0
  %1024 = vmatpush1.msra.mxu0 0.0
  %1025 = vmatprep.subr.mxu0 0.0
  %1026 = vmatpush1.msra.mxu0 0.0
  %1027 = vmatprep.subr.mxu0 0.0
  %1028 = vmatpush1.msra.mxu0 0.0
  %1029 = vmatprep.subr.mxu0 0.0
  %1030 = vmatpush1.msra.mxu0 0.0
  %1031 = vmatprep.subr.mxu0 0.0
  %1032 = vmatpush1.msra.mxu0 0.0
  %1033 = vmatprep.subr.mxu0 0.0
  %1034 = vmatpush1.msra.mxu0 0.0
  %1035 = vmatprep.subr.mxu0 0.0
  %1036 = vmatpush1.msra.mxu0 0.0
  %1037 = vmatprep.subr.mxu0 0.0
  %1038 = vmatpush1.msra.mxu0 0.0
  %1039 = vmatprep.subr.mxu0 0.0
  %1040 = vmatpush1.msra.mxu0 0.0
  %1041 = vmatprep.subr.mxu0 0.0
  %1042 = vmatpush1.msra.mxu0 0.0
  %1043 = vmatprep.subr.mxu0 0.0
  %1044 = vmatpush1.msra.mxu0 0.0
  %1045 = vmatprep.subr.mxu0 0.0
  %1046 = vmatpush1.msra.mxu0 0.0
  %1047 = vmatprep.subr.mxu0 0.0
  %1048 = vmatpush1.msra.mxu0 0.0
  %1049 = vmatprep.subr.mxu0 0.0
  %1050 = vmatpush1.msra.mxu0 0.0
  %1051 = vmatprep.subr.mxu0 0.0
  %1052 = vmatpush1.msra.mxu0 0.0
  %1053 = vmatprep.subr.mxu0 0.0
  %1054 = vmatpush1.msra.mxu0 0.0
  %1055 = vmatprep.mubr.f32.mxu0 0.0
  %1056 = vmatmul.mubr.f32.gmra.mrb[0].mxu0 %v983
  %v1057 = vpop.f32.mrb[0].mxu0
  %v1058 = vadd.f32 0.0, %v1057
  %v1059 = vpop.f32.mrb[0].mxu0
  %v1060 = vadd.f32 0.0, %v1059
  %1061 = vdwg.mxu0
  %1062 = vmatprep.subr.mxu0 %v219
  %1063 = vmatpush1.msra.mxu0 %v218
  %1064 = vmatprep.subr.mxu0 %v223
  %1065 = vmatpush1.msra.mxu0 %v222
  %1066 = vmatprep.subr.mxu0 %v227
  %1067 = vmatpush1.msra.mxu0 %v226
  %1068 = vmatprep.subr.mxu0 %v231
  %1069 = vmatpush1.msra.mxu0 %v230
  %1070 = vmatprep.subr.mxu0 %v235
  %1071 = vmatpush1.msra.mxu0 %v234
  %1072 = vmatprep.subr.mxu0 %v239
  %1073 = vmatpush1.msra.mxu0 %v238
  %1074 = vmatprep.subr.mxu0 %v243
  %1075 = vmatpush1.msra.mxu0 %v242
  %1076 = vmatprep.subr.mxu0 %v247
  %1077 = vmatpush1.msra.mxu0 %v246
  %1078 = vmatprep.subr.mxu0 %v251
  %1079 = vmatpush1.msra.mxu0 %v250
  %1080 = vmatprep.subr.mxu0 %v255
  %1081 = vmatpush1.msra.mxu0 %v254
  %1082 = vmatprep.subr.mxu0 %v259
  %1083 = vmatpush1.msra.mxu0 %v258
  %1084 = vmatprep.subr.mxu0 %v263
  %1085 = vmatpush1.msra.mxu0 %v262
  %1086 = vmatprep.subr.mxu0 %v267
  %1087 = vmatpush1.msra.mxu0 %v266
  %1088 = vmatprep.subr.mxu0 %v271
  %1089 = vmatpush1.msra.mxu0 %v270
  %1090 = vmatprep.subr.mxu0 %v275
  %1091 = vmatpush1.msra.mxu0 %v274
  %1092 = vmatprep.subr.mxu0 %v279
  %1093 = vmatpush1.msra.mxu0 %v278
  %1094 = vmatprep.subr.mxu0 0.0
  %1095 = vmatpush1.msra.mxu0 0.0
  %1096 = vmatprep.subr.mxu0 0.0
  %1097 = vmatpush1.msra.mxu0 0.0
  %1098 = vmatprep.subr.mxu0 0.0
  %1099 = vmatpush1.msra.mxu0 0.0
  %1100 = vmatprep.subr.mxu0 0.0
  %1101 = vmatpush1.msra.mxu0 0.0
  %1102 = vmatprep.subr.mxu0 0.0
  %1103 = vmatpush1.msra.mxu0 0.0
  %1104 = vmatprep.subr.mxu0 0.0
  %1105 = vmatpush1.msra.mxu0 0.0
  %1106 = vmatprep.subr.mxu0 0.0
  %1107 = vmatpush1.msra.mxu0 0.0
  %1108 = vmatprep.subr.mxu0 0.0
  %1109 = vmatpush1.msra.mxu0 0.0
  %1110 = vmatprep.subr.mxu0 0.0
  %1111 = vmatpush1.msra.mxu0 0.0
  %1112 = vmatprep.subr.mxu0 0.0
  %1113 = vmatpush1.msra.mxu0 0.0
  %1114 = vmatprep.subr.mxu0 0.0
  %1115 = vmatpush1.msra.mxu0 0.0
  %1116 = vmatprep.subr.mxu0 0.0
  %1117 = vmatpush1.msra.mxu0 0.0
  %1118 = vmatprep.subr.mxu0 0.0
  %1119 = vmatpush1.msra.mxu0 0.0
  %1120 = vmatprep.subr.mxu0 0.0
  %1121 = vmatpush1.msra.mxu0 0.0
  %1122 = vmatprep.subr.mxu0 0.0
  %1123 = vmatpush1.msra.mxu0 0.0
  %1124 = vmatprep.subr.mxu0 0.0
  %1125 = vmatpush1.msra.mxu0 0.0
  %1126 = vmatprep.mubr.f32.mxu0 0.0
  %1127 = vmatmul.mubr.f32.gmra.mrb[0].mxu0 %v983
  %v1128 = vpop.f32.mrb[0].mxu0
  %v1129 = vadd.f32 0.0, %v1128
  %v1130 = vpop.f32.mrb[0].mxu0
  %v1131 = vadd.f32 0.0, %v1130
  %1132 = vdwg.mxu0
  %v1133 = vadd.f32 %v987, %v1058
  %v1134 = vadd.f32 %v988, %v1060
  %v1135 = vadd.f32 %v989, %v1129
  %v1136 = vadd.f32 %v990, %v1131
  %v1137 = vxor.u32 %v1133, 2147483648
  %v1138 = vxor.u32 %v1134, 2147483648
  %v1139 = vxor.u32 %v1135, 2147483648
  %v1140 = vmul.f32 %v1137, 1.442695
  %v1141 = vpow.pop %v1140
  %v1142 = vmul.f32 %v1138, 1.442695
  %v1143 = vpow.pop %v1142
  %v1144 = vmul.f32 %v1139, 1.442695
  %v1145 = vpow.pop %v1144
  %v1146 = vadd.f32 %v1141, 1.0
  %v1147 = vadd.f32 %v1143, 1.0
  %v1148 = vadd.f32 %v1145, 1.0
  %v1149 = vrcp.pop %v1146
  %v1150 = vmul.f32 1.0, %v1149
  %v1151 = vrcp.pop %v1147
  %v1152 = vmul.f32 1.0, %v1151
  %v1153 = vrcp.pop %v1148
  %v1154 = vmul.f32 1.0, %v1153
  %v1155 = vtanh.pop %v1136
  %v1156 = vmul.f32 %v1152, %v981
  %v1157 = vmul.f32 %v1150, %v1155
  %v1158 = vadd.f32 %v1156, %v1157
  %v1159 = vtanh.pop %v1158
  %v1160 = vmul.f32 %v1154, %v1159
  %s1161 = scalar_lea.vmem %s4, 32
  %1162 = vst [vmem:[%s1161] sm:$0xff] %v1160
  %s1163 = scalar_lea.vmem [#allocation2], 160
  %v1164 = vld [vmem:[%s1163] sm:$0xff]
  %v1165 = vld [vmem:[%s1163 + $0x8] sm:$0xff]
  %v1166 = vld [vmem:[%s1163 + $0x10] sm:$0xff]
  %v1167 = vld [vmem:[%s1163 + $0x18] sm:$0xff]
  %1168 = vmatprep.subr.mxu0 %v217
  %1169 = vmatpush1.msra.mxu0 %v216
  %1170 = vmatprep.subr.mxu0 %v221
  %1171 = vmatpush1.msra.mxu0 %v220
  %1172 = vmatprep.subr.mxu0 %v225
  %1173 = vmatpush1.msra.mxu0 %v224
  %1174 = vmatprep.subr.mxu0 %v229
  %1175 = vmatpush1.msra.mxu0 %v228
  %1176 = vmatprep.subr.mxu0 %v233
  %1177 = vmatpush1.msra.mxu0 %v232
  %1178 = vmatprep.subr.mxu0 %v237
  %1179 = vmatpush1.msra.mxu0 %v236
  %1180 = vmatprep.subr.mxu0 %v241
  %1181 = vmatpush1.msra.mxu0 %v240
  %1182 = vmatprep.subr.mxu0 %v245
  %1183 = vmatpush1.msra.mxu0 %v244
  %1184 = vmatprep.subr.mxu0 %v249
  %1185 = vmatpush1.msra.mxu0 %v248
  %1186 = vmatprep.subr.mxu0 %v253
  %1187 = vmatpush1.msra.mxu0 %v252
  %1188 = vmatprep.subr.mxu0 %v257
  %1189 = vmatpush1.msra.mxu0 %v256
  %1190 = vmatprep.subr.mxu0 %v261
  %1191 = vmatpush1.msra.mxu0 %v260
  %1192 = vmatprep.subr.mxu0 %v265
  %1193 = vmatpush1.msra.mxu0 %v264
  %1194 = vmatprep.subr.mxu0 %v269
  %1195 = vmatpush1.msra.mxu0 %v268
  %1196 = vmatprep.subr.mxu0 %v273
  %1197 = vmatpush1.msra.mxu0 %v272
  %1198 = vmatprep.subr.mxu0 %v277
  %1199 = vmatpush1.msra.mxu0 %v276
  %1200 = vmatprep.subr.mxu0 0.0
  %1201 = vmatpush1.msra.mxu0 0.0
  %1202 = vmatprep.subr.mxu0 0.0
  %1203 = vmatpush1.msra.mxu0 0.0
  %1204 = vmatprep.subr.mxu0 0.0
  %1205 = vmatpush1.msra.mxu0 0.0
  %1206 = vmatprep.subr.mxu0 0.0
  %1207 = vmatpush1.msra.mxu0 0.0
  %1208 = vmatprep.subr.mxu0 0.0
  %1209 = vmatpush1.msra.mxu0 0.0
  %1210 = vmatprep.subr.mxu0 0.0
  %1211 = vmatpush1.msra.mxu0 0.0
  %1212 = vmatprep.subr.mxu0 0.0
  %1213 = vmatpush1.msra.mxu0 0.0
  %1214 = vmatprep.subr.mxu0 0.0
  %1215 = vmatpush1.msra.mxu0 0.0
  %1216 = vmatprep.subr.mxu0 0.0
  %1217 = vmatpush1.msra.mxu0 0.0
  %1218 = vmatprep.subr.mxu0 0.0
  %1219 = vmatpush1.msra.mxu0 0.0
  %1220 = vmatprep.subr.mxu0 0.0
  %1221 = vmatpush1.msra.mxu0 0.0
  %1222 = vmatprep.subr.mxu0 0.0
  %1223 = vmatpush1.msra.mxu0 0.0
  %1224 = vmatprep.subr.mxu0 0.0
  %1225 = vmatpush1.msra.mxu0 0.0
  %1226 = vmatprep.subr.mxu0 0.0
  %1227 = vmatpush1.msra.mxu0 0.0
  %1228 = vmatprep.subr.mxu0 0.0
  %1229 = vmatpush1.msra.mxu0 0.0
  %1230 = vmatprep.subr.mxu0 0.0
  %1231 = vmatpush1.msra.mxu0 0.0
  %1232 = vmatprep.mubr.f32.mxu0 0.0
  %1233 = vmatmul.mubr.f32.gmra.mrb[0].mxu0 %v1160
  %v1234 = vpop.f32.mrb[0].mxu0
  %v1235 = vadd.f32 0.0, %v1234
  %v1236 = vpop.f32.mrb[0].mxu0
  %v1237 = vadd.f32 0.0, %v1236
  %1238 = vdwg.mxu0
  %1239 = vmatprep.subr.mxu0 %v219
  %1240 = vmatpush1.msra.mxu0 %v218
  %1241 = vmatprep.subr.mxu0 %v223
  %1242 = vmatpush1.msra.mxu0 %v222
  %1243 = vmatprep.subr.mxu0 %v227
  %1244 = vmatpush1.msra.mxu0 %v226
  %1245 = vmatprep.subr.mxu0 %v231
  %1246 = vmatpush1.msra.mxu0 %v230
  %1247 = vmatprep.subr.mxu0 %v235
  %1248 = vmatpush1.msra.mxu0 %v234
  %1249 = vmatprep.subr.mxu0 %v239
  %1250 = vmatpush1.msra.mxu0 %v238
  %1251 = vmatprep.subr.mxu0 %v243
  %1252 = vmatpush1.msra.mxu0 %v242
  %1253 = vmatprep.subr.mxu0 %v247
  %1254 = vmatpush1.msra.mxu0 %v246
  %1255 = vmatprep.subr.mxu0 %v251
  %1256 = vmatpush1.msra.mxu0 %v250
  %1257 = vmatprep.subr.mxu0 %v255
  %1258 = vmatpush1.msra.mxu0 %v254
  %1259 = vmatprep.subr.mxu0 %v259
  %1260 = vmatpush1.msra.mxu0 %v258
  %1261 = vmatprep.subr.mxu0 %v263
  %1262 = vmatpush1.msra.mxu0 %v262
  %1263 = vmatprep.subr.mxu0 %v267
  %1264 = vmatpush1.msra.mxu0 %v266
  %1265 = vmatprep.subr.mxu0 %v271
  %1266 = vmatpush1.msra.mxu0 %v270
  %1267 = vmatprep.subr.mxu0 %v275
  %1268 = vmatpush1.msra.mxu0 %v274
  %1269 = vmatprep.subr.mxu0 %v279
  %1270 = vmatpush1.msra.mxu0 %v278
  %1271 = vmatprep.subr.mxu0 0.0
  %1272 = vmatpush1.msra.mxu0 0.0
  %1273 = vmatprep.subr.mxu0 0.0
  %1274 = vmatpush1.msra.mxu0 0.0
  %1275 = vmatprep.subr.mxu0 0.0
  %1276 = vmatpush1.msra.mxu0 0.0
  %1277 = vmatprep.subr.mxu0 0.0
  %1278 = vmatpush1.msra.mxu0 0.0
  %1279 = vmatprep.subr.mxu0 0.0
  %1280 = vmatpush1.msra.mxu0 0.0
  %1281 = vmatprep.subr.mxu0 0.0
  %1282 = vmatpush1.msra.mxu0 0.0
  %1283 = vmatprep.subr.mxu0 0.0
  %1284 = vmatpush1.msra.mxu0 0.0
  %1285 = vmatprep.subr.mxu0 0.0
  %1286 = vmatpush1.msra.mxu0 0.0
  %1287 = vmatprep.subr.mxu0 0.0
  %1288 = vmatpush1.msra.mxu0 0.0
  %1289 = vmatprep.subr.mxu0 0.0
  %1290 = vmatpush1.msra.mxu0 0.0
  %1291 = vmatprep.subr.mxu0 0.0
  %1292 = vmatpush1.msra.mxu0 0.0
  %1293 = vmatprep.subr.mxu0 0.0
  %1294 = vmatpush1.msra.mxu0 0.0
  %1295 = vmatprep.subr.mxu0 0.0
  %1296 = vmatpush1.msra.mxu0 0.0
  %1297 = vmatprep.subr.mxu0 0.0
  %1298 = vmatpush1.msra.mxu0 0.0
  %1299 = vmatprep.subr.mxu0 0.0
  %1300 = vmatpush1.msra.mxu0 0.0
  %1301 = vmatprep.subr.mxu0 0.0
  %1302 = vmatpush1.msra.mxu0 0.0
  %1303 = vmatprep.mubr.f32.mxu0 0.0
  %1304 = vmatmul.mubr.f32.gmra.mrb[0].mxu0 %v1160
  %v1305 = vpop.f32.mrb[0].mxu0
  %v1306 = vadd.f32 0.0, %v1305
  %v1307 = vpop.f32.mrb[0].mxu0
  %v1308 = vadd.f32 0.0, %v1307
  %1309 = vdwg.mxu0
  %v1310 = vadd.f32 %v1164, %v1235
  %v1311 = vadd.f32 %v1165, %v1237
  %v1312 = vadd.f32 %v1166, %v1306
  %v1313 = vadd.f32 %v1167, %v1308
  %v1314 = vxor.u32 %v1310, 2147483648
  %v1315 = vxor.u32 %v1311, 2147483648
  %v1316 = vxor.u32 %v1312, 2147483648
  %v1317 = vmul.f32 %v1314, 1.442695
  %v1318 = vpow.pop %v1317
  %v1319 = vmul.f32 %v1315, 1.442695
  %v1320 = vpow.pop %v1319
  %v1321 = vmul.f32 %v1316, 1.442695
  %v1322 = vpow.pop %v1321
  %v1323 = vadd.f32 %v1318, 1.0
  %v1324 = vadd.f32 %v1320, 1.0
  %v1325 = vadd.f32 %v1322, 1.0
  %v1326 = vrcp.pop %v1323
  %v1327 = vmul.f32 1.0, %v1326
  %v1328 = vrcp.pop %v1324
  %v1329 = vmul.f32 1.0, %v1328
  %v1330 = vrcp.pop %v1325
  %v1331 = vmul.f32 1.0, %v1330
  %v1332 = vtanh.pop %v1313
  %v1333 = vmul.f32 %v1329, %v1158
  %v1334 = vmul.f32 %v1327, %v1332
  %v1335 = vadd.f32 %v1333, %v1334
  %v1336 = vtanh.pop %v1335
  %v1337 = vmul.f32 %v1331, %v1336
  %s1338 = scalar_lea.vmem %s4, 40
  %1339 = vst [vmem:[%s1338] sm:$0xff] %v1337
  %s1340 = scalar_lea.vmem [#allocation2], 192
  %v1341 = vld [vmem:[%s1340] sm:$0xff]
  %v1342 = vld [vmem:[%s1340 + $0x8] sm:$0xff]
  %v1343 = vld [vmem:[%s1340 + $0x10] sm:$0xff]
  %v1344 = vld [vmem:[%s1340 + $0x18] sm:$0xff]
  %1345 = vmatprep.subr.mxu0 %v217
  %1346 = vmatpush1.msra.mxu0 %v216
  %1347 = vmatprep.subr.mxu0 %v221
  %1348 = vmatpush1.msra.mxu0 %v220
  %1349 = vmatprep.subr.mxu0 %v225
  %1350 = vmatpush1.msra.mxu0 %v224
  %1351 = vmatprep.subr.mxu0 %v229
  %1352 = vmatpush1.msra.mxu0 %v228
  %1353 = vmatprep.subr.mxu0 %v233
  %1354 = vmatpush1.msra.mxu0 %v232
  %1355 = vmatprep.subr.mxu0 %v237
  %1356 = vmatpush1.msra.mxu0 %v236
  %1357 = vmatprep.subr.mxu0 %v241
  %1358 = vmatpush1.msra.mxu0 %v240
  %1359 = vmatprep.subr.mxu0 %v245
  %1360 = vmatpush1.msra.mxu0 %v244
  %1361 = vmatprep.subr.mxu0 %v249
  %1362 = vmatpush1.msra.mxu0 %v248
  %1363 = vmatprep.subr.mxu0 %v253
  %1364 = vmatpush1.msra.mxu0 %v252
  %1365 = vmatprep.subr.mxu0 %v257
  %1366 = vmatpush1.msra.mxu0 %v256
  %1367 = vmatprep.subr.mxu0 %v261
  %1368 = vmatpush1.msra.mxu0 %v260
  %1369 = vmatprep.subr.mxu0 %v265
  %1370 = vmatpush1.msra.mxu0 %v264
  %1371 = vmatprep.subr.mxu0 %v269
  %1372 = vmatpush1.msra.mxu0 %v268
  %1373 = vmatprep.subr.mxu0 %v273
  %1374 = vmatpush1.msra.mxu0 %v272
  %1375 = vmatprep.subr.mxu0 %v277
  %1376 = vmatpush1.msra.mxu0 %v276
  %1377 = vmatprep.subr.mxu0 0.0
  %1378 = vmatpush1.msra.mxu0 0.0
  %1379 = vmatprep.subr.mxu0 0.0
  %1380 = vmatpush1.msra.mxu0 0.0
  %1381 = vmatprep.subr.mxu0 0.0
  %1382 = vmatpush1.msra.mxu0 0.0
  %1383 = vmatprep.subr.mxu0 0.0
  %1384 = vmatpush1.msra.mxu0 0.0
  %1385 = vmatprep.subr.mxu0 0.0
  %1386 = vmatpush1.msra.mxu0 0.0
  %1387 = vmatprep.subr.mxu0 0.0
  %1388 = vmatpush1.msra.mxu0 0.0
  %1389 = vmatprep.subr.mxu0 0.0
  %1390 = vmatpush1.msra.mxu0 0.0
  %1391 = vmatprep.subr.mxu0 0.0
  %1392 = vmatpush1.msra.mxu0 0.0
  %1393 = vmatprep.subr.mxu0 0.0
  %1394 = vmatpush1.msra.mxu0 0.0
  %1395 = vmatprep.subr.mxu0 0.0
  %1396 = vmatpush1.msra.mxu0 0.0
  %1397 = vmatprep.subr.mxu0 0.0
  %1398 = vmatpush1.msra.mxu0 0.0
  %1399 = vmatprep.subr.mxu0 0.0
  %1400 = vmatpush1.msra.mxu0 0.0
  %1401 = vmatprep.subr.mxu0 0.0
  %1402 = vmatpush1.msra.mxu0 0.0
  %1403 = vmatprep.subr.mxu0 0.0
  %1404 = vmatpush1.msra.mxu0 0.0
  %1405 = vmatprep.subr.mxu0 0.0
  %1406 = vmatpush1.msra.mxu0 0.0
  %1407 = vmatprep.subr.mxu0 0.0
  %1408 = vmatpush1.msra.mxu0 0.0
  %1409 = vmatprep.mubr.f32.mxu0 0.0
  %1410 = vmatmul.mubr.f32.gmra.mrb[0].mxu0 %v1337
  %v1411 = vpop.f32.mrb[0].mxu0
  %v1412 = vadd.f32 0.0, %v1411
  %v1413 = vpop.f32.mrb[0].mxu0
  %v1414 = vadd.f32 0.0, %v1413
  %1415 = vdwg.mxu0
  %1416 = vmatprep.subr.mxu0 %v219
  %1417 = vmatpush1.msra.mxu0 %v218
  %1418 = vmatprep.subr.mxu0 %v223
  %1419 = vmatpush1.msra.mxu0 %v222
  %1420 = vmatprep.subr.mxu0 %v227
  %1421 = vmatpush1.msra.mxu0 %v226
  %1422 = vmatprep.subr.mxu0 %v231
  %1423 = vmatpush1.msra.mxu0 %v230
  %1424 = vmatprep.subr.mxu0 %v235
  %1425 = vmatpush1.msra.mxu0 %v234
  %1426 = vmatprep.subr.mxu0 %v239
  %1427 = vmatpush1.msra.mxu0 %v238
  %1428 = vmatprep.subr.mxu0 %v243
  %1429 = vmatpush1.msra.mxu0 %v242
  %1430 = vmatprep.subr.mxu0 %v247
  %1431 = vmatpush1.msra.mxu0 %v246
  %1432 = vmatprep.subr.mxu0 %v251
  %1433 = vmatpush1.msra.mxu0 %v250
  %1434 = vmatprep.subr.mxu0 %v255
  %1435 = vmatpush1.msra.mxu0 %v254
  %1436 = vmatprep.subr.mxu0 %v259
  %1437 = vmatpush1.msra.mxu0 %v258
  %1438 = vmatprep.subr.mxu0 %v263
  %1439 = vmatpush1.msra.mxu0 %v262
  %1440 = vmatprep.subr.mxu0 %v267
  %1441 = vmatpush1.msra.mxu0 %v266
  %1442 = vmatprep.subr.mxu0 %v271
  %1443 = vmatpush1.msra.mxu0 %v270
  %1444 = vmatprep.subr.mxu0 %v275
  %1445 = vmatpush1.msra.mxu0 %v274
  %1446 = vmatprep.subr.mxu0 %v279
  %1447 = vmatpush1.msra.mxu0 %v278
  %1448 = vmatprep.subr.mxu0 0.0
  %1449 = vmatpush1.msra.mxu0 0.0
  %1450 = vmatprep.subr.mxu0 0.0
  %1451 = vmatpush1.msra.mxu0 0.0
  %1452 = vmatprep.subr.mxu0 0.0
  %1453 = vmatpush1.msra.mxu0 0.0
  %1454 = vmatprep.subr.mxu0 0.0
  %1455 = vmatpush1.msra.mxu0 0.0
  %1456 = vmatprep.subr.mxu0 0.0
  %1457 = vmatpush1.msra.mxu0 0.0
  %1458 = vmatprep.subr.mxu0 0.0
  %1459 = vmatpush1.msra.mxu0 0.0
  %1460 = vmatprep.subr.mxu0 0.0
  %1461 = vmatpush1.msra.mxu0 0.0
  %1462 = vmatprep.subr.mxu0 0.0
  %1463 = vmatpush1.msra.mxu0 0.0
  %1464 = vmatprep.subr.mxu0 0.0
  %1465 = vmatpush1.msra.mxu0 0.0
  %1466 = vmatprep.subr.mxu0 0.0
  %1467 = vmatpush1.msra.mxu0 0.0
  %1468 = vmatprep.subr.mxu0 0.0
  %1469 = vmatpush1.msra.mxu0 0.0
  %1470 = vmatprep.subr.mxu0 0.0
  %1471 = vmatpush1.msra.mxu0 0.0
  %1472 = vmatprep.subr.mxu0 0.0
  %1473 = vmatpush1.msra.mxu0 0.0
  %1474 = vmatprep.subr.mxu0 0.0
  %1475 = vmatpush1.msra.mxu0 0.0
  %1476 = vmatprep.subr.mxu0 0.0
  %1477 = vmatpush1.msra.mxu0 0.0
  %1478 = vmatprep.subr.mxu0 0.0
  %1479 = vmatpush1.msra.mxu0 0.0
  %1480 = vmatprep.mubr.f32.mxu0 0.0
  %1481 = vmatmul.mubr.f32.gmra.mrb[0].mxu0 %v1337
  %v1482 = vpop.f32.mrb[0].mxu0
  %v1483 = vadd.f32 0.0, %v1482
  %v1484 = vpop.f32.mrb[0].mxu0
  %v1485 = vadd.f32 0.0, %v1484
  %1486 = vdwg.mxu0
  %v1487 = vadd.f32 %v1341, %v1412
  %v1488 = vadd.f32 %v1342, %v1414
  %v1489 = vadd.f32 %v1343, %v1483
  %v1490 = vadd.f32 %v1344, %v1485
  %v1491 = vxor.u32 %v1487, 2147483648
  %v1492 = vxor.u32 %v1488, 2147483648
  %v1493 = vxor.u32 %v1489, 2147483648
  %v1494 = vmul.f32 %v1491, 1.442695
  %v1495 = vpow.pop %v1494
  %v1496 = vmul.f32 %v1492, 1.442695
  %v1497 = vpow.pop %v1496
  %v1498 = vmul.f32 %v1493, 1.442695
  %v1499 = vpow.pop %v1498
  %v1500 = vadd.f32 %v1495, 1.0
  %v1501 = vadd.f32 %v1497, 1.0
  %v1502 = vadd.f32 %v1499, 1.0
  %v1503 = vrcp.pop %v1500
  %v1504 = vmul.f32 1.0, %v1503
  %v1505 = vrcp.pop %v1501
  %v1506 = vmul.f32 1.0, %v1505
  %v1507 = vrcp.pop %v1502
  %v1508 = vmul.f32 1.0, %v1507
  %v1509 = vtanh.pop %v1490
  %v1510 = vmul.f32 %v1506, %v1335
  %v1511 = vmul.f32 %v1504, %v1509
  %v1512 = vadd.f32 %v1510, %v1511
  %v1513 = vtanh.pop %v1512
  %v1514 = vmul.f32 %v1508, %v1513
  %s1515 = scalar_lea.vmem %s4, 48
  %1516 = vst [vmem:[%s1515] sm:$0xff] %v1514
  %s1517 = scalar_lea.vmem [#allocation2], 224
  %v1518 = vld [vmem:[%s1517] sm:$0xff]
  %v1519 = vld [vmem:[%s1517 + $0x8] sm:$0xff]
  %v1520 = vld [vmem:[%s1517 + $0x10] sm:$0xff]
  %v1521 = vld [vmem:[%s1517 + $0x18] sm:$0xff]
  %1522 = vmatprep.subr.mxu0 %v217
  %1523 = vmatpush1.msra.mxu0 %v216
  %1524 = vmatprep.subr.mxu0 %v221
  %1525 = vmatpush1.msra.mxu0 %v220
  %1526 = vmatprep.subr.mxu0 %v225
  %1527 = vmatpush1.msra.mxu0 %v224
  %1528 = vmatprep.subr.mxu0 %v229
  %1529 = vmatpush1.msra.mxu0 %v228
  %1530 = vmatprep.subr.mxu0 %v233
  %1531 = vmatpush1.msra.mxu0 %v232
  %1532 = vmatprep.subr.mxu0 %v237
  %1533 = vmatpush1.msra.mxu0 %v236
  %1534 = vmatprep.subr.mxu0 %v241
  %1535 = vmatpush1.msra.mxu0 %v240
  %1536 = vmatprep.subr.mxu0 %v245
  %1537 = vmatpush1.msra.mxu0 %v244
  %1538 = vmatprep.subr.mxu0 %v249
  %1539 = vmatpush1.msra.mxu0 %v248
  %1540 = vmatprep.subr.mxu0 %v253
  %1541 = vmatpush1.msra.mxu0 %v252
  %1542 = vmatprep.subr.mxu0 %v257
  %1543 = vmatpush1.msra.mxu0 %v256
  %1544 = vmatprep.subr.mxu0 %v261
  %1545 = vmatpush1.msra.mxu0 %v260
  %1546 = vmatprep.subr.mxu0 %v265
  %1547 = vmatpush1.msra.mxu0 %v264
  %1548 = vmatprep.subr.mxu0 %v269
  %1549 = vmatpush1.msra.mxu0 %v268
  %1550 = vmatprep.subr.mxu0 %v273
  %1551 = vmatpush1.msra.mxu0 %v272
  %1552 = vmatprep.subr.mxu0 %v277
  %1553 = vmatpush1.msra.mxu0 %v276
  %1554 = vmatprep.subr.mxu0 0.0
  %1555 = vmatpush1.msra.mxu0 0.0
  %1556 = vmatprep.subr.mxu0 0.0
  %1557 = vmatpush1.msra.mxu0 0.0
  %1558 = vmatprep.subr.mxu0 0.0
  %1559 = vmatpush1.msra.mxu0 0.0
  %1560 = vmatprep.subr.mxu0 0.0
  %1561 = vmatpush1.msra.mxu0 0.0
  %1562 = vmatprep.subr.mxu0 0.0
  %1563 = vmatpush1.msra.mxu0 0.0
  %1564 = vmatprep.subr.mxu0 0.0
  %1565 = vmatpush1.msra.mxu0 0.0
  %1566 = vmatprep.subr.mxu0 0.0
  %1567 = vmatpush1.msra.mxu0 0.0
  %1568 = vmatprep.subr.mxu0 0.0
  %1569 = vmatpush1.msra.mxu0 0.0
  %1570 = vmatprep.subr.mxu0 0.0
  %1571 = vmatpush1.msra.mxu0 0.0
  %1572 = vmatprep.subr.mxu0 0.0
  %1573 = vmatpush1.msra.mxu0 0.0
  %1574 = vmatprep.subr.mxu0 0.0
  %1575 = vmatpush1.msra.mxu0 0.0
  %1576 = vmatprep.subr.mxu0 0.0
  %1577 = vmatpush1.msra.mxu0 0.0
  %1578 = vmatprep.subr.mxu0 0.0
  %1579 = vmatpush1.msra.mxu0 0.0
  %1580 = vmatprep.subr.mxu0 0.0
  %1581 = vmatpush1.msra.mxu0 0.0
  %1582 = vmatprep.subr.mxu0 0.0
  %1583 = vmatpush1.msra.mxu0 0.0
  %1584 = vmatprep.subr.mxu0 0.0
  %1585 = vmatpush1.msra.mxu0 0.0
  %1586 = vmatprep.mubr.f32.mxu0 0.0
  %1587 = vmatmul.mubr.f32.gmra.mrb[0].mxu0 %v1514
  %v1588 = vpop.f32.mrb[0].mxu0
  %v1589 = vadd.f32 0.0, %v1588
  %v1590 = vpop.f32.mrb[0].mxu0
  %v1591 = vadd.f32 0.0, %v1590
  %1592 = vdwg.mxu0
  %1593 = vmatprep.subr.mxu0 %v219
  %1594 = vmatpush1.msra.mxu0 %v218
  %1595 = vmatprep.subr.mxu0 %v223
  %1596 = vmatpush1.msra.mxu0 %v222
  %1597 = vmatprep.subr.mxu0 %v227
  %1598 = vmatpush1.msra.mxu0 %v226
  %1599 = vmatprep.subr.mxu0 %v231
  %1600 = vmatpush1.msra.mxu0 %v230
  %1601 = vmatprep.subr.mxu0 %v235
  %1602 = vmatpush1.msra.mxu0 %v234
  %1603 = vmatprep.subr.mxu0 %v239
  %1604 = vmatpush1.msra.mxu0 %v238
  %1605 = vmatprep.subr.mxu0 %v243
  %1606 = vmatpush1.msra.mxu0 %v242
  %1607 = vmatprep.subr.mxu0 %v247
  %1608 = vmatpush1.msra.mxu0 %v246
  %1609 = vmatprep.subr.mxu0 %v251
  %1610 = vmatpush1.msra.mxu0 %v250
  %1611 = vmatprep.subr.mxu0 %v255
  %1612 = vmatpush1.msra.mxu0 %v254
  %1613 = vmatprep.subr.mxu0 %v259
  %1614 = vmatpush1.msra.mxu0 %v258
  %1615 = vmatprep.subr.mxu0 %v263
  %1616 = vmatpush1.msra.mxu0 %v262
  %1617 = vmatprep.subr.mxu0 %v267
  %1618 = vmatpush1.msra.mxu0 %v266
  %1619 = vmatprep.subr.mxu0 %v271
  %1620 = vmatpush1.msra.mxu0 %v270
  %1621 = vmatprep.subr.mxu0 %v275
  %1622 = vmatpush1.msra.mxu0 %v274
  %1623 = vmatprep.subr.mxu0 %v279
  %1624 = vmatpush1.msra.mxu0 %v278
  %1625 = vmatprep.subr.mxu0 0.0
  %1626 = vmatpush1.msra.mxu0 0.0
  %1627 = vmatprep.subr.mxu0 0.0
  %1628 = vmatpush1.msra.mxu0 0.0
  %1629 = vmatprep.subr.mxu0 0.0
  %1630 = vmatpush1.msra.mxu0 0.0
  %1631 = vmatprep.subr.mxu0 0.0
  %1632 = vmatpush1.msra.mxu0 0.0
  %1633 = vmatprep.subr.mxu0 0.0
  %1634 = vmatpush1.msra.mxu0 0.0
  %1635 = vmatprep.subr.mxu0 0.0
  %1636 = vmatpush1.msra.mxu0 0.0
  %1637 = vmatprep.subr.mxu0 0.0
  %1638 = vmatpush1.msra.mxu0 0.0
  %1639 = vmatprep.subr.mxu0 0.0
  %1640 = vmatpush1.msra.mxu0 0.0
  %1641 = vmatprep.subr.mxu0 0.0
  %1642 = vmatpush1.msra.mxu0 0.0
  %1643 = vmatprep.subr.mxu0 0.0
  %1644 = vmatpush1.msra.mxu0 0.0
  %1645 = vmatprep.subr.mxu0 0.0
  %1646 = vmatpush1.msra.mxu0 0.0
  %1647 = vmatprep.subr.mxu0 0.0
  %1648 = vmatpush1.msra.mxu0 0.0
  %1649 = vmatprep.subr.mxu0 0.0
  %1650 = vmatpush1.msra.mxu0 0.0
  %1651 = vmatprep.subr.mxu0 0.0
  %1652 = vmatpush1.msra.mxu0 0.0
  %1653 = vmatprep.subr.mxu0 0.0
  %1654 = vmatpush1.msra.mxu0 0.0
  %1655 = vmatprep.subr.mxu0 0.0
  %1656 = vmatpush1.msra.mxu0 0.0
  %1657 = vmatprep.mubr.f32.mxu0 0.0
  %1658 = vmatmul.mubr.f32.gmra.mrb[0].mxu0 %v1514
  %v1659 = vpop.f32.mrb[0].mxu0
  %v1660 = vadd.f32 0.0, %v1659
  %v1661 = vpop.f32.mrb[0].mxu0
  %v1662 = vadd.f32 0.0, %v1661
  %1663 = vdwg.mxu0
  %v1664 = vadd.f32 %v1518, %v1589
  %v1665 = vadd.f32 %v1519, %v1591
  %v1666 = vadd.f32 %v1520, %v1660
  %v1667 = vadd.f32 %v1521, %v1662
  %v1668 = vxor.u32 %v1664, 2147483648
  %v1669 = vxor.u32 %v1665, 2147483648
  %v1670 = vxor.u32 %v1666, 2147483648
  %v1671 = vmul.f32 %v1668, 1.442695
  %v1672 = vpow.pop %v1671
  %v1673 = vmul.f32 %v1669, 1.442695
  %v1674 = vpow.pop %v1673
  %v1675 = vmul.f32 %v1670, 1.442695
  %v1676 = vpow.pop %v1675
  %v1677 = vadd.f32 %v1672, 1.0
  %v1678 = vadd.f32 %v1674, 1.0
  %v1679 = vadd.f32 %v1676, 1.0
  %v1680 = vrcp.pop %v1677
  %v1681 = vmul.f32 1.0, %v1680
  %v1682 = vrcp.pop %v1678
  %v1683 = vmul.f32 1.0, %v1682
  %v1684 = vrcp.pop %v1679
  %v1685 = vmul.f32 1.0, %v1684
  %v1686 = vtanh.pop %v1667
  %v1687 = vmul.f32 %v1683, %v1512
  %v1688 = vmul.f32 %v1681, %v1686
  %v1689 = vadd.f32 %v1687, %v1688
  %v1690 = vtanh.pop %v1689
  %v1691 = vmul.f32 %v1685, %v1690
  %s1692 = scalar_lea.vmem %s4, 56
  %1693 = vst [vmem:[%s1692] sm:$0xff] %v1691
  %1694 = vst [vmem:[%s5] sm:$0xff] %v1689
  // Predicated region
  $region18: #{encoder_forward.1} parent=0 // pred_check
    _
  $region19: #{encoder_forward.1} parent=0 // pred_check_branch
    %1696 = sbr.rel (0) target = $region21
  $region20: #{encoder_forward.1} parent=0 // pred_region
    _
  $region21: #{encoder_forward.1} parent=0 // pred_fallthru
    _
  // Predicated region
  $region22: #{encoder_forward.1} parent=0 // pred_check
    _
  $region23: #{encoder_forward.1} parent=0 // pred_check_branch
    %1698 = sbr.rel (0) target = $region25
  $region24: #{encoder_forward.1} parent=0 // pred_region
    _
  $region25: #{encoder_forward.1} parent=0 // pred_fallthru
    _
  // Predicated region
  $region26: #{encoder_forward.1} parent=0 // pred_check
    _
  $region27: #{encoder_forward.1} parent=0 // pred_check_branch
    %1700 = sbr.rel (0) target = $region29
  $region28: #{encoder_forward.1} parent=0 // pred_region
    _
  $region29: #{encoder_forward.1} parent=0 // pred_fallthru
    _
  // Predicated region
  $region30: #{encoder_forward.1} parent=0 // pred_check
    _
  $region31: #{encoder_forward.1} parent=0 // pred_check_branch
    %1702 = sbr.rel (0) target = $region33
  $region32: #{encoder_forward.1} parent=0 // pred_region
    _
  $region33: #{encoder_forward.1} parent=0 // pred_fallthru
    _

</llo_original>
